<compile_context>
chip_gen: v7x
topology: tpu7x:2x2x1
jax: 0.10.0
libtpu: 0.0.40
codegen_flags: <defaults>
</compile_context>

<pallas_src>
import jax
import jax.numpy as jnp
from jax.experimental import pallas as pl
from jax.experimental.pallas import tpu as pltpu

LANES = 128  # TPU lane width; used only for the in-VMEM last-layer pad.


def _round_up(v, m):
    return ((v + m - 1) // m) * m


def _num_tensorcores_per_chip():
    """2 on v7x-class parts (2 TCs/chip), else 1.  Conservative fallback = 1."""
    try:
        kind = (jax.devices()[0].device_kind or "").lower()
    except Exception:
        return 1
    return 2 if "v7" in kind else 1


def ikmlp_kernel(x_ref, w1_ref, b1_ref, w2_ref, b2_ref, w3_ref, b3_ref, o_ref):
    x = x_ref[...]                                   # (tb, 3)
    w1 = w1_ref[...]                                 # (3, 64)

    # Layer 1 (K=3) on the VPU: three broadcast mul-adds; the MXU is busy on
    # layers 2/3 anyway and a 3-deep contraction wastes 97% of its depth.
    h1 = (x[:, 0:1] * w1[0:1, :]
          + x[:, 1:2] * w1[1:2, :]
          + x[:, 2:3] * w1[2:3, :]
          + b1_ref[...])
    h1 = jnp.maximum(h1, 0.0)

    # Layers 2 and 3 on the MXU with f32 accumulation.
    h2 = jnp.dot(h1, w2_ref[...], preferred_element_type=jnp.float32) + b2_ref[...]
    h2 = jnp.maximum(h2, 0.0)
    y = jnp.dot(h2, w3_ref[...], preferred_element_type=jnp.float32) + b3_ref[...]

    # w3 is lane-padded (VMEM-only); store just the real Dout columns so the
    # HBM writeback is 16 B/row instead of 512 B/row.
    dout = o_ref.shape[-1]
    o_ref[...] = y[:, :dout].astype(o_ref.dtype)


def ikmlp_forward(x, params, *, batch_tile=2048, min_kernel_batch=256):
    """x: (B, 3) float32. params: dict with w1,b1,w2,b2,w3,b3 (weights as (in,out))."""
    B, Din = x.shape
    w1, b1 = params["w1"], params["b1"]
    w2, b2 = params["w2"], params["b2"]
    w3, b3 = params["w3"], params["b3"]
    H1, H2, Dout = w1.shape[1], w2.shape[1], w3.shape[1]

    if B < min_kernel_batch:
        # At tiny batches the kernel is 100% launch/DMA/step overhead; XLA's
        # fused HLO is strictly faster for a 3->64->128->4 MLP on a few rows.
        return reference_forward(x, params)

    # Lane-padded last-layer weight/bias for the MXU dot (VMEM side only).
    # Prefer the pre-padded copies from init_params (no per-call XLA pad ops).
    w3p = params.get("w3_padded")
    b3p = params.get("b3_padded")
    if w3p is None:
        w3p = jnp.pad(w3, ((0, 0), (0, LANES - Dout)))
    if b3p is None:
        b3p = jnp.pad(b3, ((0, 0), (0, LANES - Dout)))
    H3 = w3p.shape[1]

    # Tile sizing:
    #   * single TC (v5e/v6e): grid is a serial loop -> one tile as big as the
    #     batch/batch_tile allows (multiple of 8 sublanes only).
    #   * v7x (2 TCs): keep >= 2 grid steps and an even step count so both
    #     cores stay busy through the last iteration.
    n_tc = _num_tensorcores_per_chip()
    tb = min(batch_tile, _round_up(B, 8))
    if n_tc > 1 and B >= n_tc * min_kernel_batch:
        tb = min(tb, _round_up(pl.cdiv(B, n_tc), 8))
        B_pad = _round_up(B, n_tc * tb)
    else:
        B_pad = _round_up(B, tb)

    if B_pad != B:
        x = jnp.pad(x, ((0, B_pad - B), (0, 0)))
    grid = (B_pad // tb,)

    flops = 2 * B_pad * (Din * H1 + H1 * H2 + H2 * H3)
    bytes_accessed = 4 * (B_pad * Din + B_pad * Dout
                          + Din * H1 + H1 + H1 * H2 + H2 + H2 * H3 + H3)

    out = pl.pallas_call(
        ikmlp_kernel,
        out_shape=jax.ShapeDtypeStruct((B_pad, Dout), jnp.float32),
        grid_spec=pltpu.PrefetchScalarGridSpec(
            num_scalar_prefetch=0,
            grid=grid,
            in_specs=[
                pl.BlockSpec((tb, Din), lambda i: (i, 0)),   # x tile (batch-tiled)
                # Weights/biases: constant index_map -> same VMEM block reused
                # across all grid steps (no per-step re-DMA).
                pl.BlockSpec((Din, H1), lambda i: (0, 0)),   # w1 (full)
                pl.BlockSpec((1, H1), lambda i: (0, 0)),     # b1
                pl.BlockSpec((H1, H2), lambda i: (0, 0)),    # w2 (full)
                pl.BlockSpec((1, H2), lambda i: (0, 0)),     # b2
                pl.BlockSpec((H2, H3), lambda i: (0, 0)),    # w3 (lane-padded, VMEM only)
                pl.BlockSpec((1, H3), lambda i: (0, 0)),     # b3 (lane-padded, VMEM only)
            ],
            out_specs=pl.BlockSpec((tb, Dout), lambda i: (i, 0)),  # real 4 lanes in HBM
        ),
        compiler_params=pltpu.CompilerParams(
            dimension_semantics=("parallel",),
        ),
        cost_estimate=pl.CostEstimate(
            flops=flops, transcendentals=0, bytes_accessed=bytes_accessed),
    )(x, w1, b1, w2, b2, w3p, b3p)

    if B_pad != B:
        out = out[:B]
    return out


def init_params(key):
    """Deterministic init matching PyTorch nn.Linear shapes: fc1(3,64), fc2(64,128), fc3(128,4).
    Weights returned already transposed to (in, out) for the kernel; the last
    layer is also pre-padded to 128 lanes (w3_padded/b3_padded) for the kernel's
    in-VMEM MXU dot so no pad ops run per forward call."""
    sizes = [(3, 64), (64, 128), (128, 4)]
    params = {}
    keys = jax.random.split(key, 2 * len(sizes))
    for idx, (din, dout) in enumerate(sizes):
        bound = 1.0 / jnp.sqrt(jnp.float32(din))  # PyTorch default uniform bound
        w = jax.random.uniform(keys[2 * idx], (din, dout), jnp.float32, -bound, bound)
        b = jax.random.uniform(keys[2 * idx + 1], (1, dout), jnp.float32, -bound, bound)
        params[f"w{idx + 1}"] = w
        params[f"b{idx + 1}"] = b
    dout_last = sizes[-1][1]
    params["w3_padded"] = jnp.pad(params["w3"], ((0, 0), (0, LANES - dout_last)))
    params["b3_padded"] = jnp.pad(params["b3"], ((0, 0), (0, LANES - dout_last)))
    return params


def reference_forward(x, params):
    h1 = jnp.maximum(x @ params["w1"] + params["b1"], 0.0)
    h2 = jnp.maximum(h1 @ params["w2"] + params["b2"], 0.0)
    return h2 @ params["w3"] + params["b3"]


if __name__ == "__main__":
    key = jax.random.PRNGKey(0)
    kx, kp = jax.random.split(key)

    # Batch large enough to exercise the kernel path (single big tile on
    # v5e/v6e, a 2-step even grid on v7x); still tiny in absolute terms.
    B = 512
    x = jax.random.normal(kx, (B, 3), jnp.float32)
    params = init_params(kp)

    out = ikmlp_forward(x, params)
    out = jax.block_until_ready(out)

    ref = reference_forward(x, params)
    assert out.shape == (B, 4), out.shape
    assert jnp.allclose(out, ref, atol=1e-4, rtol=1e-4), "mismatch vs reference"

    # Tiny-batch path falls back to plain JAX (kernel would be pure overhead).
    out_small = jax.block_until_ready(ikmlp_forward(x[:8], params))
    assert out_small.shape == (8, 4)
    assert jnp.allclose(out_small, ref[:8], atol=1e-4, rtol=1e-4), "small-batch mismatch"

    print("KERNEL_OK")
</pallas_src>

<mosaic_0001>
module attributes {stable_mosaic.version = 11 : i64} {
  func.func @ikmlp_kernel(%arg0: i32, %arg1: memref<512x3xf32, #tpu.memory_space<vmem>>, %arg2: memref<3x64xf32, #tpu.memory_space<vmem>>, %arg3: memref<1x64xf32, #tpu.memory_space<vmem>>, %arg4: memref<64x128xf32, #tpu.memory_space<vmem>>, %arg5: memref<1x128xf32, #tpu.memory_space<vmem>>, %arg6: memref<128x128xf32, #tpu.memory_space<vmem>>, %arg7: memref<1x128xf32, #tpu.memory_space<vmem>>, %arg8: memref<512x4xf32, #tpu.memory_space<vmem>>) attributes {dimension_semantics = [#tpu.dimension_semantics<parallel>], iteration_bounds = array<i64: 1>, scalar_prefetch = 0 : i64, scratch_operands = 0 : i64, tpu.core_type = #tpu.core_type<tc>, window_params = [{transform_indices = @transform_0, window_bounds = array<i64: 512, 3>}, {pipeline_mode = #tpu.pipeline_mode<synchronous>, transform_indices = @transform_1, window_bounds = array<i64: 3, 64>}, {pipeline_mode = #tpu.pipeline_mode<synchronous>, transform_indices = @transform_2, window_bounds = array<i64: 1, 64>}, {pipeline_mode = #tpu.pipeline_mode<synchronous>, transform_indices = @transform_3, window_bounds = array<i64: 64, 128>}, {pipeline_mode = #tpu.pipeline_mode<synchronous>, transform_indices = @transform_4, window_bounds = array<i64: 1, 128>}, {pipeline_mode = #tpu.pipeline_mode<synchronous>, transform_indices = @transform_5, window_bounds = array<i64: 128, 128>}, {pipeline_mode = #tpu.pipeline_mode<synchronous>, transform_indices = @transform_6, window_bounds = array<i64: 1, 128>}, {transform_indices = @transform_7, window_bounds = array<i64: 512, 4>}]} {
    %c0 = arith.constant 0 : index
    %c0_0 = arith.constant 0 : index
    %0 = vector.load %arg1[%c0, %c0_0] : memref<512x3xf32, #tpu.memory_space<vmem>>, vector<512x3xf32>
    %c0_1 = arith.constant 0 : index
    %c0_2 = arith.constant 0 : index
    %1 = vector.load %arg2[%c0_1, %c0_2] : memref<3x64xf32, #tpu.memory_space<vmem>>, vector<3x64xf32>
    %2 = vector.extract_strided_slice %0 {offsets = [0, 0], sizes = [512, 1], strides = [1, 1]} : vector<512x3xf32> to vector<512x1xf32>
    %3 = vector.extract_strided_slice %1 {offsets = [0, 0], sizes = [1, 64], strides = [1, 1]} : vector<3x64xf32> to vector<1x64xf32>
    %4 = vector.broadcast %2 : vector<512x1xf32> to vector<512x64xf32>
    %5 = vector.broadcast %3 : vector<1x64xf32> to vector<512x64xf32>
    %6 = arith.mulf %4, %5 : vector<512x64xf32>
    %7 = vector.extract_strided_slice %0 {offsets = [0, 1], sizes = [512, 1], strides = [1, 1]} : vector<512x3xf32> to vector<512x1xf32>
    %8 = vector.extract_strided_slice %1 {offsets = [1, 0], sizes = [1, 64], strides = [1, 1]} : vector<3x64xf32> to vector<1x64xf32>
    %9 = vector.broadcast %7 : vector<512x1xf32> to vector<512x64xf32>
    %10 = vector.broadcast %8 : vector<1x64xf32> to vector<512x64xf32>
    %11 = arith.mulf %9, %10 : vector<512x64xf32>
    %12 = arith.addf %6, %11 : vector<512x64xf32>
    %13 = vector.extract_strided_slice %0 {offsets = [0, 2], sizes = [512, 1], strides = [1, 1]} : vector<512x3xf32> to vector<512x1xf32>
    %14 = vector.extract_strided_slice %1 {offsets = [2, 0], sizes = [1, 64], strides = [1, 1]} : vector<3x64xf32> to vector<1x64xf32>
    %15 = vector.broadcast %13 : vector<512x1xf32> to vector<512x64xf32>
    %16 = vector.broadcast %14 : vector<1x64xf32> to vector<512x64xf32>
    %17 = arith.mulf %15, %16 : vector<512x64xf32>
    %18 = arith.addf %12, %17 : vector<512x64xf32>
    %c0_3 = arith.constant 0 : index
    %c0_4 = arith.constant 0 : index
    %19 = vector.load %arg3[%c0_3, %c0_4] : memref<1x64xf32, #tpu.memory_space<vmem>>, vector<1x64xf32>
    %20 = vector.broadcast %19 : vector<1x64xf32> to vector<512x64xf32>
    %21 = arith.addf %18, %20 : vector<512x64xf32>
    %cst = arith.constant 0.000000e+00 : f32
    %22 = vector.broadcast %cst : f32 to vector<512x64xf32>
    %23 = arith.maximumf %21, %22 : vector<512x64xf32>
    %c0_5 = arith.constant 0 : index
    %c0_6 = arith.constant 0 : index
    %24 = vector.load %arg4[%c0_5, %c0_6] : memref<64x128xf32, #tpu.memory_space<vmem>>, vector<64x128xf32>
    %cst_7 = arith.constant dense<0.000000e+00> : vector<512x128xf32>
    %25 = tpu.matmul %23, %24, %cst_7 {dimension_numbers = #tpu.dot_dimension_numbers<[1], [0], [0], [1], [0, 0, 1, 1], [], []>} : vector<512x64xf32>, vector<64x128xf32>, vector<512x128xf32> -> vector<512x128xf32>
    %c0_8 = arith.constant 0 : index
    %c0_9 = arith.constant 0 : index
    %26 = vector.load %arg5[%c0_8, %c0_9] : memref<1x128xf32, #tpu.memory_space<vmem>>, vector<1x128xf32>
    %27 = vector.broadcast %26 : vector<1x128xf32> to vector<512x128xf32>
    %28 = arith.addf %25, %27 : vector<512x128xf32>
    %cst_10 = arith.constant 0.000000e+00 : f32
    %29 = vector.broadcast %cst_10 : f32 to vector<512x128xf32>
    %30 = arith.maximumf %28, %29 : vector<512x128xf32>
    %c0_11 = arith.constant 0 : index
    %c0_12 = arith.constant 0 : index
    %31 = vector.load %arg6[%c0_11, %c0_12] : memref<128x128xf32, #tpu.memory_space<vmem>>, vector<128x128xf32>
    %cst_13 = arith.constant dense<0.000000e+00> : vector<512x128xf32>
    %32 = tpu.matmul %30, %31, %cst_13 {dimension_numbers = #tpu.dot_dimension_numbers<[1], [0], [0], [1], [0, 0, 1, 1], [], []>} : vector<512x128xf32>, vector<128x128xf32>, vector<512x128xf32> -> vector<512x128xf32>
    %c0_14 = arith.constant 0 : index
    %c0_15 = arith.constant 0 : index
    %33 = vector.load %arg7[%c0_14, %c0_15] : memref<1x128xf32, #tpu.memory_space<vmem>>, vector<1x128xf32>
    %34 = vector.broadcast %33 : vector<1x128xf32> to vector<512x128xf32>
    %35 = arith.addf %32, %34 : vector<512x128xf32>
    %36 = vector.extract_strided_slice %35 {offsets = [0, 0], sizes = [512, 4], strides = [1, 1]} : vector<512x128xf32> to vector<512x4xf32>
    %c0_16 = arith.constant 0 : index
    %c0_17 = arith.constant 0 : index
    %37 = vector.load %arg8[%c0_16, %c0_17] : memref<512x4xf32, #tpu.memory_space<vmem>>, vector<512x4xf32>
    tpu.vector_store %arg8[%c0_16, %c0_17], %36 {strides = array<i32>} : memref<512x4xf32, #tpu.memory_space<vmem>>, vector<512x4xf32>,
    return
  }
  func.func @transform_0(%arg0: i32) -> (i32, i32) {
    %c0_i32 = arith.constant 0 : i32
    %c0_i32_0 = arith.constant 0 : i32
    return %arg0, %c0_i32 : i32, i32
  }
  func.func @transform_1(%arg0: i32) -> (i32, i32) {
    %c0_i32 = arith.constant 0 : i32
    %c0_i32_0 = arith.constant 0 : i32
    %c0_i32_1 = arith.constant 0 : i32
    return %c0_i32, %c0_i32_0 : i32, i32
  }
  func.func @transform_2(%arg0: i32) -> (i32, i32) {
    %c0_i32 = arith.constant 0 : i32
    %c0_i32_0 = arith.constant 0 : i32
    %c0_i32_1 = arith.constant 0 : i32
    return %c0_i32, %c0_i32_0 : i32, i32
  }
  func.func @transform_3(%arg0: i32) -> (i32, i32) {
    %c0_i32 = arith.constant 0 : i32
    %c0_i32_0 = arith.constant 0 : i32
    %c0_i32_1 = arith.constant 0 : i32
    return %c0_i32, %c0_i32_0 : i32, i32
  }
  func.func @transform_4(%arg0: i32) -> (i32, i32) {
    %c0_i32 = arith.constant 0 : i32
    %c0_i32_0 = arith.constant 0 : i32
    %c0_i32_1 = arith.constant 0 : i32
    return %c0_i32, %c0_i32_0 : i32, i32
  }
  func.func @transform_5(%arg0: i32) -> (i32, i32) {
    %c0_i32 = arith.constant 0 : i32
    %c0_i32_0 = arith.constant 0 : i32
    %c0_i32_1 = arith.constant 0 : i32
    return %c0_i32, %c0_i32_0 : i32, i32
  }
  func.func @transform_6(%arg0: i32) -> (i32, i32) {
    %c0_i32 = arith.constant 0 : i32
    %c0_i32_0 = arith.constant 0 : i32
    %c0_i32_1 = arith.constant 0 : i32
    return %c0_i32, %c0_i32_0 : i32, i32
  }
  func.func @transform_7(%arg0: i32) -> (i32, i32) {
    %c0_i32 = arith.constant 0 : i32
    %c0_i32_0 = arith.constant 0 : i32
    return %arg0, %c0_i32 : i32, i32
  }
}

</mosaic_0001>

<llo_original>
// kernel: tpu_custom_call.1
$region0: #{tpu_custom_call.1}
  #allocation0 [shape = 'u32[]', space=smem, size = 0x4, offset = 0x4, fixed_abs, tag = 'smem constant byte address 0x4 - core index']
  #allocation1 [shape = 'u32[144,128]{1,0:T(1,128)}', space=vmem, size = 0x12000, scoped, tag = 'internal scratch']
  %s0 = inlined_call_operand.vmem [shape: f32[512,3], index: 0, kind: input, shape index: {}]
  %s1 = inlined_call_operand.vmem [shape: f32[3,64], index: 1, kind: input, shape index: {}]
  %s2 = inlined_call_operand.vmem [shape: f32[1,64], index: 2, kind: input, shape index: {}]
  %s3 = inlined_call_operand.vmem [shape: f32[64,128], index: 3, kind: input, shape index: {}]
  %s4 = inlined_call_operand.vmem [shape: f32[1,128], index: 4, kind: input, shape index: {}]
  %s5 = inlined_call_operand.vmem [shape: f32[128,128], index: 5, kind: input, shape index: {}]
  %s6 = inlined_call_operand.vmem [shape: f32[1,128], index: 6, kind: input, shape index: {}]
  %s7 = inlined_call_operand.vmem [shape: f32[512,4], index: 7, kind: output, shape index: {}]
  %s8 = sld [smem:[#allocation0]]
  $region38: #{tpu_custom_call.1} parent=0
    _
  %s10 = ssub.s32 1, %s8
  %s11 = scalar_select 0, %s10, %s8
  // Predicated region
  $region2: #{tpu_custom_call.1} parent=0 // pred_check
    _
  $region3: #{tpu_custom_call.1} parent=0 // pred_check_branch
    %13 = sbr.rel (0) target = $region5
  $region4: #{tpu_custom_call.1} parent=0 // pred_region
    _
  $region5: #{tpu_custom_call.1} parent=0 // pred_fallthru
    _
  // Predicated region
  $region6: #{tpu_custom_call.1} parent=0 // pred_check
    _
  $region7: #{tpu_custom_call.1} parent=0 // pred_check_branch
    %15 = sbr.rel (0) target = $region9
  $region8: #{tpu_custom_call.1} parent=0 // pred_region
    _
  $region9: #{tpu_custom_call.1} parent=0 // pred_fallthru
    _
  // Predicated region
  $region10: #{tpu_custom_call.1} parent=0 // pred_check
    _
  $region11: #{tpu_custom_call.1} parent=0 // pred_check_branch
    %17 = sbr.rel (0) target = $region13
  $region12: #{tpu_custom_call.1} parent=0 // pred_region
    _
  $region13: #{tpu_custom_call.1} parent=0 // pred_fallthru
    _
  // Predicated region
  $region14: #{tpu_custom_call.1} parent=0 // pred_check
    _
  $region15: #{tpu_custom_call.1} parent=0 // pred_check_branch
    %19 = sbr.rel (0) target = $region17
  $region16: #{tpu_custom_call.1} parent=0 // pred_region
    _
  $region17: #{tpu_custom_call.1} parent=0 // pred_fallthru
    _
  // Predicated region
  $region18: #{tpu_custom_call.1} parent=0 // pred_check
    _
  $region19: #{tpu_custom_call.1} parent=0 // pred_check_branch
    %21 = sbr.rel (0) target = $region21
  $region20: #{tpu_custom_call.1} parent=0 // pred_region
    _
  $region21: #{tpu_custom_call.1} parent=0 // pred_fallthru
    _
  // Predicated region
  $region22: #{tpu_custom_call.1} parent=0 // pred_check
    _
  $region23: #{tpu_custom_call.1} parent=0 // pred_check_branch
    %23 = sbr.rel (0) target = $region25
  $region24: #{tpu_custom_call.1} parent=0 // pred_region
    _
  $region25: #{tpu_custom_call.1} parent=0 // pred_fallthru
    _
  // Predicated region
  $region26: #{tpu_custom_call.1} parent=0 // pred_check
    _
  $region27: #{tpu_custom_call.1} parent=0 // pred_check_branch
    %25 = sbr.rel (0) target = $region29
  $region28: #{tpu_custom_call.1} parent=0 // pred_region
    _
  $region29: #{tpu_custom_call.1} parent=0 // pred_fallthru
    _
  %v26 = vld [vmem:[%s0] sm:$0xff]
  %v27 = vld [vmem:[%s0 + $0x8] sm:$0xff]
  %v28 = vld [vmem:[%s0 + $0x10] sm:$0xff]
  %v29 = vld [vmem:[%s0 + $0x18] sm:$0xff]
  %v30 = vld [vmem:[%s0 + $0x20] sm:$0xff]
  %v31 = vld [vmem:[%s0 + $0x28] sm:$0xff]
  %v32 = vld [vmem:[%s0 + $0x30] sm:$0xff]
  %v33 = vld [vmem:[%s0 + $0x38] sm:$0xff]
  %v34 = vld [vmem:[%s0 + $0x40] sm:$0xff]
  %v35 = vld [vmem:[%s0 + $0x48] sm:$0xff]
  %v36 = vld [vmem:[%s0 + $0x50] sm:$0xff]
  %v37 = vld [vmem:[%s0 + $0x58] sm:$0xff]
  %v38 = vld [vmem:[%s0 + $0x60] sm:$0xff]
  %v39 = vld [vmem:[%s0 + $0x68] sm:$0xff]
  %v40 = vld [vmem:[%s0 + $0x70] sm:$0xff]
  %v41 = vld [vmem:[%s0 + $0x78] sm:$0xff]
  %v42 = vld [vmem:[%s0 + $0x80] sm:$0xff]
  %v43 = vld [vmem:[%s0 + $0x88] sm:$0xff]
  %v44 = vld [vmem:[%s0 + $0x90] sm:$0xff]
  %v45 = vld [vmem:[%s0 + $0x98] sm:$0xff]
  %v46 = vld [vmem:[%s0 + $0xa0] sm:$0xff]
  %v47 = vld [vmem:[%s0 + $0xa8] sm:$0xff]
  %v48 = vld [vmem:[%s0 + $0xb0] sm:$0xff]
  %v49 = vld [vmem:[%s0 + $0xb8] sm:$0xff]
  %v50 = vld [vmem:[%s0 + $0xc0] sm:$0xff]
  %v51 = vld [vmem:[%s0 + $0xc8] sm:$0xff]
  %v52 = vld [vmem:[%s0 + $0xd0] sm:$0xff]
  %v53 = vld [vmem:[%s0 + $0xd8] sm:$0xff]
  %v54 = vld [vmem:[%s0 + $0xe0] sm:$0xff]
  %v55 = vld [vmem:[%s0 + $0xe8] sm:$0xff]
  %v56 = vld [vmem:[%s0 + $0xf0] sm:$0xff]
  %v57 = vld [vmem:[%s0 + $0xf8] sm:$0xff]
  %v58 = vld [vmem:[%s0 + $0x100] sm:$0xff]
  %v59 = vld [vmem:[%s0 + $0x108] sm:$0xff]
  %v60 = vld [vmem:[%s0 + $0x110] sm:$0xff]
  %v61 = vld [vmem:[%s0 + $0x118] sm:$0xff]
  %v62 = vld [vmem:[%s0 + $0x120] sm:$0xff]
  %v63 = vld [vmem:[%s0 + $0x128] sm:$0xff]
  %v64 = vld [vmem:[%s0 + $0x130] sm:$0xff]
  %v65 = vld [vmem:[%s0 + $0x138] sm:$0xff]
  %v66 = vld [vmem:[%s0 + $0x140] sm:$0xff]
  %v67 = vld [vmem:[%s0 + $0x148] sm:$0xff]
  %v68 = vld [vmem:[%s0 + $0x150] sm:$0xff]
  %v69 = vld [vmem:[%s0 + $0x158] sm:$0xff]
  %v70 = vld [vmem:[%s0 + $0x160] sm:$0xff]
  %v71 = vld [vmem:[%s0 + $0x168] sm:$0xff]
  %v72 = vld [vmem:[%s0 + $0x170] sm:$0xff]
  %v73 = vld [vmem:[%s0 + $0x178] sm:$0xff]
  %v74 = vld [vmem:[%s0 + $0x180] sm:$0xff]
  %v75 = vld [vmem:[%s0 + $0x188] sm:$0xff]
  %v76 = vld [vmem:[%s0 + $0x190] sm:$0xff]
  %v77 = vld [vmem:[%s0 + $0x198] sm:$0xff]
  %v78 = vld [vmem:[%s0 + $0x1a0] sm:$0xff]
  %v79 = vld [vmem:[%s0 + $0x1a8] sm:$0xff]
  %v80 = vld [vmem:[%s0 + $0x1b0] sm:$0xff]
  %v81 = vld [vmem:[%s0 + $0x1b8] sm:$0xff]
  %v82 = vld [vmem:[%s0 + $0x1c0] sm:$0xff]
  %v83 = vld [vmem:[%s0 + $0x1c8] sm:$0xff]
  %v84 = vld [vmem:[%s0 + $0x1d0] sm:$0xff]
  %v85 = vld [vmem:[%s0 + $0x1d8] sm:$0xff]
  %v86 = vld [vmem:[%s0 + $0x1e0] sm:$0xff]
  %v87 = vld [vmem:[%s0 + $0x1e8] sm:$0xff]
  %v88 = vld [vmem:[%s0 + $0x1f0] sm:$0xff]
  %v89 = vld [vmem:[%s0 + $0x1f8] sm:$0xff]
  %v90 = vld [vmem:[%s1] sm:$0x7]
  %92 = vset.pattern.permute.xlu0 0
  %93 = vperm.xlu0 %92, %v26
  %v94 = vpop.permute.xlu0 %93
  %97 = vset.pattern.permute.xlu0 0
  %98 = vperm.xlu0 %97, %v27
  %v99 = vpop.permute.xlu0 %98
  %102 = vset.pattern.permute.xlu0 0
  %103 = vperm.xlu0 %102, %v28
  %v104 = vpop.permute.xlu0 %103
  %107 = vset.pattern.permute.xlu0 0
  %108 = vperm.xlu0 %107, %v29
  %v109 = vpop.permute.xlu0 %108
  %112 = vset.pattern.permute.xlu0 0
  %113 = vperm.xlu0 %112, %v30
  %v114 = vpop.permute.xlu0 %113
  %117 = vset.pattern.permute.xlu0 0
  %118 = vperm.xlu0 %117, %v31
  %v119 = vpop.permute.xlu0 %118
  %122 = vset.pattern.permute.xlu0 0
  %123 = vperm.xlu0 %122, %v32
  %v124 = vpop.permute.xlu0 %123
  %127 = vset.pattern.permute.xlu0 0
  %128 = vperm.xlu0 %127, %v33
  %v129 = vpop.permute.xlu0 %128
  %132 = vset.pattern.permute.xlu0 0
  %133 = vperm.xlu0 %132, %v34
  %v134 = vpop.permute.xlu0 %133
  %137 = vset.pattern.permute.xlu0 0
  %138 = vperm.xlu0 %137, %v35
  %v139 = vpop.permute.xlu0 %138
  %142 = vset.pattern.permute.xlu0 0
  %143 = vperm.xlu0 %142, %v36
  %v144 = vpop.permute.xlu0 %143
  %147 = vset.pattern.permute.xlu0 0
  %148 = vperm.xlu0 %147, %v37
  %v149 = vpop.permute.xlu0 %148
  %152 = vset.pattern.permute.xlu0 0
  %153 = vperm.xlu0 %152, %v38
  %v154 = vpop.permute.xlu0 %153
  %157 = vset.pattern.permute.xlu0 0
  %158 = vperm.xlu0 %157, %v39
  %v159 = vpop.permute.xlu0 %158
  %162 = vset.pattern.permute.xlu0 0
  %163 = vperm.xlu0 %162, %v40
  %v164 = vpop.permute.xlu0 %163
  %167 = vset.pattern.permute.xlu0 0
  %168 = vperm.xlu0 %167, %v41
  %v169 = vpop.permute.xlu0 %168
  %172 = vset.pattern.permute.xlu0 0
  %173 = vperm.xlu0 %172, %v42
  %v174 = vpop.permute.xlu0 %173
  %177 = vset.pattern.permute.xlu0 0
  %178 = vperm.xlu0 %177, %v43
  %v179 = vpop.permute.xlu0 %178
  %182 = vset.pattern.permute.xlu0 0
  %183 = vperm.xlu0 %182, %v44
  %v184 = vpop.permute.xlu0 %183
  %187 = vset.pattern.permute.xlu0 0
  %188 = vperm.xlu0 %187, %v45
  %v189 = vpop.permute.xlu0 %188
  %192 = vset.pattern.permute.xlu0 0
  %193 = vperm.xlu0 %192, %v46
  %v194 = vpop.permute.xlu0 %193
  %197 = vset.pattern.permute.xlu0 0
  %198 = vperm.xlu0 %197, %v47
  %v199 = vpop.permute.xlu0 %198
  %202 = vset.pattern.permute.xlu0 0
  %203 = vperm.xlu0 %202, %v48
  %v204 = vpop.permute.xlu0 %203
  %207 = vset.pattern.permute.xlu0 0
  %208 = vperm.xlu0 %207, %v49
  %v209 = vpop.permute.xlu0 %208
  %212 = vset.pattern.permute.xlu0 0
  %213 = vperm.xlu0 %212, %v50
  %v214 = vpop.permute.xlu0 %213
  %217 = vset.pattern.permute.xlu0 0
  %218 = vperm.xlu0 %217, %v51
  %v219 = vpop.permute.xlu0 %218
  %222 = vset.pattern.permute.xlu0 0
  %223 = vperm.xlu0 %222, %v52
  %v224 = vpop.permute.xlu0 %223
  %227 = vset.pattern.permute.xlu0 0
  %228 = vperm.xlu0 %227, %v53
  %v229 = vpop.permute.xlu0 %228
  %232 = vset.pattern.permute.xlu0 0
  %233 = vperm.xlu0 %232, %v54
  %v234 = vpop.permute.xlu0 %233
  %237 = vset.pattern.permute.xlu0 0
  %238 = vperm.xlu0 %237, %v55
  %v239 = vpop.permute.xlu0 %238
  %242 = vset.pattern.permute.xlu0 0
  %243 = vperm.xlu0 %242, %v56
  %v244 = vpop.permute.xlu0 %243
  %247 = vset.pattern.permute.xlu0 0
  %248 = vperm.xlu0 %247, %v57
  %v249 = vpop.permute.xlu0 %248
  %252 = vset.pattern.permute.xlu0 0
  %253 = vperm.xlu0 %252, %v58
  %v254 = vpop.permute.xlu0 %253
  %257 = vset.pattern.permute.xlu0 0
  %258 = vperm.xlu0 %257, %v59
  %v259 = vpop.permute.xlu0 %258
  %262 = vset.pattern.permute.xlu0 0
  %263 = vperm.xlu0 %262, %v60
  %v264 = vpop.permute.xlu0 %263
  %267 = vset.pattern.permute.xlu0 0
  %268 = vperm.xlu0 %267, %v61
  %v269 = vpop.permute.xlu0 %268
  %272 = vset.pattern.permute.xlu0 0
  %273 = vperm.xlu0 %272, %v62
  %v274 = vpop.permute.xlu0 %273
  %277 = vset.pattern.permute.xlu0 0
  %278 = vperm.xlu0 %277, %v63
  %v279 = vpop.permute.xlu0 %278
  %282 = vset.pattern.permute.xlu0 0
  %283 = vperm.xlu0 %282, %v64
  %v284 = vpop.permute.xlu0 %283
  %287 = vset.pattern.permute.xlu0 0
  %288 = vperm.xlu0 %287, %v65
  %v289 = vpop.permute.xlu0 %288
  %292 = vset.pattern.permute.xlu0 0
  %293 = vperm.xlu0 %292, %v66
  %v294 = vpop.permute.xlu0 %293
  %297 = vset.pattern.permute.xlu0 0
  %298 = vperm.xlu0 %297, %v67
  %v299 = vpop.permute.xlu0 %298
  %302 = vset.pattern.permute.xlu0 0
  %303 = vperm.xlu0 %302, %v68
  %v304 = vpop.permute.xlu0 %303
  %307 = vset.pattern.permute.xlu0 0
  %308 = vperm.xlu0 %307, %v69
  %v309 = vpop.permute.xlu0 %308
  %312 = vset.pattern.permute.xlu0 0
  %313 = vperm.xlu0 %312, %v70
  %v314 = vpop.permute.xlu0 %313
  %317 = vset.pattern.permute.xlu0 0
  %318 = vperm.xlu0 %317, %v71
  %v319 = vpop.permute.xlu0 %318
  %322 = vset.pattern.permute.xlu0 0
  %323 = vperm.xlu0 %322, %v72
  %v324 = vpop.permute.xlu0 %323
  %327 = vset.pattern.permute.xlu0 0
  %328 = vperm.xlu0 %327, %v73
  %v329 = vpop.permute.xlu0 %328
  %332 = vset.pattern.permute.xlu0 0
  %333 = vperm.xlu0 %332, %v74
  %v334 = vpop.permute.xlu0 %333
  %337 = vset.pattern.permute.xlu0 0
  %338 = vperm.xlu0 %337, %v75
  %v339 = vpop.permute.xlu0 %338
  %342 = vset.pattern.permute.xlu0 0
  %343 = vperm.xlu0 %342, %v76
  %v344 = vpop.permute.xlu0 %343
  %347 = vset.pattern.permute.xlu0 0
  %348 = vperm.xlu0 %347, %v77
  %v349 = vpop.permute.xlu0 %348
  %352 = vset.pattern.permute.xlu0 0
  %353 = vperm.xlu0 %352, %v78
  %v354 = vpop.permute.xlu0 %353
  %357 = vset.pattern.permute.xlu0 0
  %358 = vperm.xlu0 %357, %v79
  %v359 = vpop.permute.xlu0 %358
  %362 = vset.pattern.permute.xlu0 0
  %363 = vperm.xlu0 %362, %v80
  %v364 = vpop.permute.xlu0 %363
  %367 = vset.pattern.permute.xlu0 0
  %368 = vperm.xlu0 %367, %v81
  %v369 = vpop.permute.xlu0 %368
  %372 = vset.pattern.permute.xlu0 0
  %373 = vperm.xlu0 %372, %v82
  %v374 = vpop.permute.xlu0 %373
  %377 = vset.pattern.permute.xlu0 0
  %378 = vperm.xlu0 %377, %v83
  %v379 = vpop.permute.xlu0 %378
  %382 = vset.pattern.permute.xlu0 0
  %383 = vperm.xlu0 %382, %v84
  %v384 = vpop.permute.xlu0 %383
  %387 = vset.pattern.permute.xlu0 0
  %388 = vperm.xlu0 %387, %v85
  %v389 = vpop.permute.xlu0 %388
  %392 = vset.pattern.permute.xlu0 0
  %393 = vperm.xlu0 %392, %v86
  %v394 = vpop.permute.xlu0 %393
  %397 = vset.pattern.permute.xlu0 0
  %398 = vperm.xlu0 %397, %v87
  %v399 = vpop.permute.xlu0 %398
  %402 = vset.pattern.permute.xlu0 0
  %403 = vperm.xlu0 %402, %v88
  %v404 = vpop.permute.xlu0 %403
  %407 = vset.pattern.permute.xlu0 0
  %408 = vperm.xlu0 %407, %v89
  %v409 = vpop.permute.xlu0 %408
  %v411 = vlaneseq
  %v412 = vshrl.u32 %v411, 7
  %v413 = vsub.s32 0, %v412
  %v414 = vrot.slane %v90, %v413
  %v415 = vmul.f32 %v94, %v414
  %v416 = vmul.f32 %v99, %v414
  %v417 = vmul.f32 %v104, %v414
  %v418 = vmul.f32 %v109, %v414
  %v419 = vmul.f32 %v114, %v414
  %v420 = vmul.f32 %v119, %v414
  %v421 = vmul.f32 %v124, %v414
  %v422 = vmul.f32 %v129, %v414
  %v423 = vmul.f32 %v134, %v414
  %v424 = vmul.f32 %v139, %v414
  %v425 = vmul.f32 %v144, %v414
  %v426 = vmul.f32 %v149, %v414
  %v427 = vmul.f32 %v154, %v414
  %v428 = vmul.f32 %v159, %v414
  %v429 = vmul.f32 %v164, %v414
  %v430 = vmul.f32 %v169, %v414
  %v431 = vmul.f32 %v174, %v414
  %v432 = vmul.f32 %v179, %v414
  %v433 = vmul.f32 %v184, %v414
  %v434 = vmul.f32 %v189, %v414
  %v435 = vmul.f32 %v194, %v414
  %v436 = vmul.f32 %v199, %v414
  %v437 = vmul.f32 %v204, %v414
  %v438 = vmul.f32 %v209, %v414
  %v439 = vmul.f32 %v214, %v414
  %v440 = vmul.f32 %v219, %v414
  %v441 = vmul.f32 %v224, %v414
  %v442 = vmul.f32 %v229, %v414
  %v443 = vmul.f32 %v234, %v414
  %v444 = vmul.f32 %v239, %v414
  %v445 = vmul.f32 %v244, %v414
  %v446 = vmul.f32 %v249, %v414
  %v447 = vmul.f32 %v254, %v414
  %v448 = vmul.f32 %v259, %v414
  %v449 = vmul.f32 %v264, %v414
  %v450 = vmul.f32 %v269, %v414
  %v451 = vmul.f32 %v274, %v414
  %v452 = vmul.f32 %v279, %v414
  %v453 = vmul.f32 %v284, %v414
  %v454 = vmul.f32 %v289, %v414
  %v455 = vmul.f32 %v294, %v414
  %v456 = vmul.f32 %v299, %v414
  %v457 = vmul.f32 %v304, %v414
  %v458 = vmul.f32 %v309, %v414
  %v459 = vmul.f32 %v314, %v414
  %v460 = vmul.f32 %v319, %v414
  %v461 = vmul.f32 %v324, %v414
  %v462 = vmul.f32 %v329, %v414
  %v463 = vmul.f32 %v334, %v414
  %v464 = vmul.f32 %v339, %v414
  %v465 = vmul.f32 %v344, %v414
  %v466 = vmul.f32 %v349, %v414
  %v467 = vmul.f32 %v354, %v414
  %v468 = vmul.f32 %v359, %v414
  %v469 = vmul.f32 %v364, %v414
  %v470 = vmul.f32 %v369, %v414
  %v471 = vmul.f32 %v374, %v414
  %v472 = vmul.f32 %v379, %v414
  %v473 = vmul.f32 %v384, %v414
  %v474 = vmul.f32 %v389, %v414
  %v475 = vmul.f32 %v394, %v414
  %v476 = vmul.f32 %v399, %v414
  %v477 = vmul.f32 %v404, %v414
  %v478 = vmul.f32 %v409, %v414
  %479 = vset.pattern.permute.xlu0 1
  %480 = vperm.xlu0 %479, %v26
  %v481 = vpop.permute.xlu0 %480
  %483 = vset.pattern.permute.xlu0 1
  %484 = vperm.xlu0 %483, %v27
  %v485 = vpop.permute.xlu0 %484
  %487 = vset.pattern.permute.xlu0 1
  %488 = vperm.xlu0 %487, %v28
  %v489 = vpop.permute.xlu0 %488
  %491 = vset.pattern.permute.xlu0 1
  %492 = vperm.xlu0 %491, %v29
  %v493 = vpop.permute.xlu0 %492
  %495 = vset.pattern.permute.xlu0 1
  %496 = vperm.xlu0 %495, %v30
  %v497 = vpop.permute.xlu0 %496
  %499 = vset.pattern.permute.xlu0 1
  %500 = vperm.xlu0 %499, %v31
  %v501 = vpop.permute.xlu0 %500
  %503 = vset.pattern.permute.xlu0 1
  %504 = vperm.xlu0 %503, %v32
  %v505 = vpop.permute.xlu0 %504
  %507 = vset.pattern.permute.xlu0 1
  %508 = vperm.xlu0 %507, %v33
  %v509 = vpop.permute.xlu0 %508
  %511 = vset.pattern.permute.xlu0 1
  %512 = vperm.xlu0 %511, %v34
  %v513 = vpop.permute.xlu0 %512
  %515 = vset.pattern.permute.xlu0 1
  %516 = vperm.xlu0 %515, %v35
  %v517 = vpop.permute.xlu0 %516
  %519 = vset.pattern.permute.xlu0 1
  %520 = vperm.xlu0 %519, %v36
  %v521 = vpop.permute.xlu0 %520
  %523 = vset.pattern.permute.xlu0 1
  %524 = vperm.xlu0 %523, %v37
  %v525 = vpop.permute.xlu0 %524
  %527 = vset.pattern.permute.xlu0 1
  %528 = vperm.xlu0 %527, %v38
  %v529 = vpop.permute.xlu0 %528
  %531 = vset.pattern.permute.xlu0 1
  %532 = vperm.xlu0 %531, %v39
  %v533 = vpop.permute.xlu0 %532
  %535 = vset.pattern.permute.xlu0 1
  %536 = vperm.xlu0 %535, %v40
  %v537 = vpop.permute.xlu0 %536
  %539 = vset.pattern.permute.xlu0 1
  %540 = vperm.xlu0 %539, %v41
  %v541 = vpop.permute.xlu0 %540
  %543 = vset.pattern.permute.xlu0 1
  %544 = vperm.xlu0 %543, %v42
  %v545 = vpop.permute.xlu0 %544
  %547 = vset.pattern.permute.xlu0 1
  %548 = vperm.xlu0 %547, %v43
  %v549 = vpop.permute.xlu0 %548
  %551 = vset.pattern.permute.xlu0 1
  %552 = vperm.xlu0 %551, %v44
  %v553 = vpop.permute.xlu0 %552
  %555 = vset.pattern.permute.xlu0 1
  %556 = vperm.xlu0 %555, %v45
  %v557 = vpop.permute.xlu0 %556
  %559 = vset.pattern.permute.xlu0 1
  %560 = vperm.xlu0 %559, %v46
  %v561 = vpop.permute.xlu0 %560
  %563 = vset.pattern.permute.xlu0 1
  %564 = vperm.xlu0 %563, %v47
  %v565 = vpop.permute.xlu0 %564
  %567 = vset.pattern.permute.xlu0 1
  %568 = vperm.xlu0 %567, %v48
  %v569 = vpop.permute.xlu0 %568
  %571 = vset.pattern.permute.xlu0 1
  %572 = vperm.xlu0 %571, %v49
  %v573 = vpop.permute.xlu0 %572
  %575 = vset.pattern.permute.xlu0 1
  %576 = vperm.xlu0 %575, %v50
  %v577 = vpop.permute.xlu0 %576
  %579 = vset.pattern.permute.xlu0 1
  %580 = vperm.xlu0 %579, %v51
  %v581 = vpop.permute.xlu0 %580
  %583 = vset.pattern.permute.xlu0 1
  %584 = vperm.xlu0 %583, %v52
  %v585 = vpop.permute.xlu0 %584
  %587 = vset.pattern.permute.xlu0 1
  %588 = vperm.xlu0 %587, %v53
  %v589 = vpop.permute.xlu0 %588
  %591 = vset.pattern.permute.xlu0 1
  %592 = vperm.xlu0 %591, %v54
  %v593 = vpop.permute.xlu0 %592
  %595 = vset.pattern.permute.xlu0 1
  %596 = vperm.xlu0 %595, %v55
  %v597 = vpop.permute.xlu0 %596
  %599 = vset.pattern.permute.xlu0 1
  %600 = vperm.xlu0 %599, %v56
  %v601 = vpop.permute.xlu0 %600
  %603 = vset.pattern.permute.xlu0 1
  %604 = vperm.xlu0 %603, %v57
  %v605 = vpop.permute.xlu0 %604
  %607 = vset.pattern.permute.xlu0 1
  %608 = vperm.xlu0 %607, %v58
  %v609 = vpop.permute.xlu0 %608
  %611 = vset.pattern.permute.xlu0 1
  %612 = vperm.xlu0 %611, %v59
  %v613 = vpop.permute.xlu0 %612
  %615 = vset.pattern.permute.xlu0 1
  %616 = vperm.xlu0 %615, %v60
  %v617 = vpop.permute.xlu0 %616
  %619 = vset.pattern.permute.xlu0 1
  %620 = vperm.xlu0 %619, %v61
  %v621 = vpop.permute.xlu0 %620
  %623 = vset.pattern.permute.xlu0 1
  %624 = vperm.xlu0 %623, %v62
  %v625 = vpop.permute.xlu0 %624
  %627 = vset.pattern.permute.xlu0 1
  %628 = vperm.xlu0 %627, %v63
  %v629 = vpop.permute.xlu0 %628
  %631 = vset.pattern.permute.xlu0 1
  %632 = vperm.xlu0 %631, %v64
  %v633 = vpop.permute.xlu0 %632
  %635 = vset.pattern.permute.xlu0 1
  %636 = vperm.xlu0 %635, %v65
  %v637 = vpop.permute.xlu0 %636
  %639 = vset.pattern.permute.xlu0 1
  %640 = vperm.xlu0 %639, %v66
  %v641 = vpop.permute.xlu0 %640
  %643 = vset.pattern.permute.xlu0 1
  %644 = vperm.xlu0 %643, %v67
  %v645 = vpop.permute.xlu0 %644
  %647 = vset.pattern.permute.xlu0 1
  %648 = vperm.xlu0 %647, %v68
  %v649 = vpop.permute.xlu0 %648
  %651 = vset.pattern.permute.xlu0 1
  %652 = vperm.xlu0 %651, %v69
  %v653 = vpop.permute.xlu0 %652
  %655 = vset.pattern.permute.xlu0 1
  %656 = vperm.xlu0 %655, %v70
  %v657 = vpop.permute.xlu0 %656
  %659 = vset.pattern.permute.xlu0 1
  %660 = vperm.xlu0 %659, %v71
  %v661 = vpop.permute.xlu0 %660
  %663 = vset.pattern.permute.xlu0 1
  %664 = vperm.xlu0 %663, %v72
  %v665 = vpop.permute.xlu0 %664
  %667 = vset.pattern.permute.xlu0 1
  %668 = vperm.xlu0 %667, %v73
  %v669 = vpop.permute.xlu0 %668
  %671 = vset.pattern.permute.xlu0 1
  %672 = vperm.xlu0 %671, %v74
  %v673 = vpop.permute.xlu0 %672
  %675 = vset.pattern.permute.xlu0 1
  %676 = vperm.xlu0 %675, %v75
  %v677 = vpop.permute.xlu0 %676
  %679 = vset.pattern.permute.xlu0 1
  %680 = vperm.xlu0 %679, %v76
  %v681 = vpop.permute.xlu0 %680
  %683 = vset.pattern.permute.xlu0 1
  %684 = vperm.xlu0 %683, %v77
  %v685 = vpop.permute.xlu0 %684
  %687 = vset.pattern.permute.xlu0 1
  %688 = vperm.xlu0 %687, %v78
  %v689 = vpop.permute.xlu0 %688
  %691 = vset.pattern.permute.xlu0 1
  %692 = vperm.xlu0 %691, %v79
  %v693 = vpop.permute.xlu0 %692
  %695 = vset.pattern.permute.xlu0 1
  %696 = vperm.xlu0 %695, %v80
  %v697 = vpop.permute.xlu0 %696
  %699 = vset.pattern.permute.xlu0 1
  %700 = vperm.xlu0 %699, %v81
  %v701 = vpop.permute.xlu0 %700
  %703 = vset.pattern.permute.xlu0 1
  %704 = vperm.xlu0 %703, %v82
  %v705 = vpop.permute.xlu0 %704
  %707 = vset.pattern.permute.xlu0 1
  %708 = vperm.xlu0 %707, %v83
  %v709 = vpop.permute.xlu0 %708
  %711 = vset.pattern.permute.xlu0 1
  %712 = vperm.xlu0 %711, %v84
  %v713 = vpop.permute.xlu0 %712
  %715 = vset.pattern.permute.xlu0 1
  %716 = vperm.xlu0 %715, %v85
  %v717 = vpop.permute.xlu0 %716
  %719 = vset.pattern.permute.xlu0 1
  %720 = vperm.xlu0 %719, %v86
  %v721 = vpop.permute.xlu0 %720
  %723 = vset.pattern.permute.xlu0 1
  %724 = vperm.xlu0 %723, %v87
  %v725 = vpop.permute.xlu0 %724
  %727 = vset.pattern.permute.xlu0 1
  %728 = vperm.xlu0 %727, %v88
  %v729 = vpop.permute.xlu0 %728
  %731 = vset.pattern.permute.xlu0 1
  %732 = vperm.xlu0 %731, %v89
  %v733 = vpop.permute.xlu0 %732
  %v735 = vlaneseq
  %v736 = vshrl.u32 %v735, 7
  %v737 = vsub.s32 1, %v736
  %v738 = vrot.slane %v90, %v737
  %v739 = vmul.f32 %v481, %v738
  %v740 = vmul.f32 %v485, %v738
  %v741 = vmul.f32 %v489, %v738
  %v742 = vmul.f32 %v493, %v738
  %v743 = vmul.f32 %v497, %v738
  %v744 = vmul.f32 %v501, %v738
  %v745 = vmul.f32 %v505, %v738
  %v746 = vmul.f32 %v509, %v738
  %v747 = vmul.f32 %v513, %v738
  %v748 = vmul.f32 %v517, %v738
  %v749 = vmul.f32 %v521, %v738
  %v750 = vmul.f32 %v525, %v738
  %v751 = vmul.f32 %v529, %v738
  %v752 = vmul.f32 %v533, %v738
  %v753 = vmul.f32 %v537, %v738
  %v754 = vmul.f32 %v541, %v738
  %v755 = vmul.f32 %v545, %v738
  %v756 = vmul.f32 %v549, %v738
  %v757 = vmul.f32 %v553, %v738
  %v758 = vmul.f32 %v557, %v738
  %v759 = vmul.f32 %v561, %v738
  %v760 = vmul.f32 %v565, %v738
  %v761 = vmul.f32 %v569, %v738
  %v762 = vmul.f32 %v573, %v738
  %v763 = vmul.f32 %v577, %v738
  %v764 = vmul.f32 %v581, %v738
  %v765 = vmul.f32 %v585, %v738
  %v766 = vmul.f32 %v589, %v738
  %v767 = vmul.f32 %v593, %v738
  %v768 = vmul.f32 %v597, %v738
  %v769 = vmul.f32 %v601, %v738
  %v770 = vmul.f32 %v605, %v738
  %v771 = vmul.f32 %v609, %v738
  %v772 = vmul.f32 %v613, %v738
  %v773 = vmul.f32 %v617, %v738
  %v774 = vmul.f32 %v621, %v738
  %v775 = vmul.f32 %v625, %v738
  %v776 = vmul.f32 %v629, %v738
  %v777 = vmul.f32 %v633, %v738
  %v778 = vmul.f32 %v637, %v738
  %v779 = vmul.f32 %v641, %v738
  %v780 = vmul.f32 %v645, %v738
  %v781 = vmul.f32 %v649, %v738
  %v782 = vmul.f32 %v653, %v738
  %v783 = vmul.f32 %v657, %v738
  %v784 = vmul.f32 %v661, %v738
  %v785 = vmul.f32 %v665, %v738
  %v786 = vmul.f32 %v669, %v738
  %v787 = vmul.f32 %v673, %v738
  %v788 = vmul.f32 %v677, %v738
  %v789 = vmul.f32 %v681, %v738
  %v790 = vmul.f32 %v685, %v738
  %v791 = vmul.f32 %v689, %v738
  %v792 = vmul.f32 %v693, %v738
  %v793 = vmul.f32 %v697, %v738
  %v794 = vmul.f32 %v701, %v738
  %v795 = vmul.f32 %v705, %v738
  %v796 = vmul.f32 %v709, %v738
  %v797 = vmul.f32 %v713, %v738
  %v798 = vmul.f32 %v717, %v738
  %v799 = vmul.f32 %v721, %v738
  %v800 = vmul.f32 %v725, %v738
  %v801 = vmul.f32 %v729, %v738
  %v802 = vmul.f32 %v733, %v738
  %v803 = vadd.f32 %v415, %v739
  %v804 = vadd.f32 %v416, %v740
  %v805 = vadd.f32 %v417, %v741
  %v806 = vadd.f32 %v418, %v742
  %v807 = vadd.f32 %v419, %v743
  %v808 = vadd.f32 %v420, %v744
  %v809 = vadd.f32 %v421, %v745
  %v810 = vadd.f32 %v422, %v746
  %v811 = vadd.f32 %v423, %v747
  %v812 = vadd.f32 %v424, %v748
  %v813 = vadd.f32 %v425, %v749
  %v814 = vadd.f32 %v426, %v750
  %v815 = vadd.f32 %v427, %v751
  %v816 = vadd.f32 %v428, %v752
  %v817 = vadd.f32 %v429, %v753
  %v818 = vadd.f32 %v430, %v754
  %v819 = vadd.f32 %v431, %v755
  %v820 = vadd.f32 %v432, %v756
  %v821 = vadd.f32 %v433, %v757
  %v822 = vadd.f32 %v434, %v758
  %v823 = vadd.f32 %v435, %v759
  %v824 = vadd.f32 %v436, %v760
  %v825 = vadd.f32 %v437, %v761
  %v826 = vadd.f32 %v438, %v762
  %v827 = vadd.f32 %v439, %v763
  %v828 = vadd.f32 %v440, %v764
  %v829 = vadd.f32 %v441, %v765
  %v830 = vadd.f32 %v442, %v766
  %v831 = vadd.f32 %v443, %v767
  %v832 = vadd.f32 %v444, %v768
  %v833 = vadd.f32 %v445, %v769
  %v834 = vadd.f32 %v446, %v770
  %v835 = vadd.f32 %v447, %v771
  %v836 = vadd.f32 %v448, %v772
  %v837 = vadd.f32 %v449, %v773
  %v838 = vadd.f32 %v450, %v774
  %v839 = vadd.f32 %v451, %v775
  %v840 = vadd.f32 %v452, %v776
  %v841 = vadd.f32 %v453, %v777
  %v842 = vadd.f32 %v454, %v778
  %v843 = vadd.f32 %v455, %v779
  %v844 = vadd.f32 %v456, %v780
  %v845 = vadd.f32 %v457, %v781
  %v846 = vadd.f32 %v458, %v782
  %v847 = vadd.f32 %v459, %v783
  %v848 = vadd.f32 %v460, %v784
  %v849 = vadd.f32 %v461, %v785
  %v850 = vadd.f32 %v462, %v786
  %v851 = vadd.f32 %v463, %v787
  %v852 = vadd.f32 %v464, %v788
  %v853 = vadd.f32 %v465, %v789
  %v854 = vadd.f32 %v466, %v790
  %v855 = vadd.f32 %v467, %v791
  %v856 = vadd.f32 %v468, %v792
  %v857 = vadd.f32 %v469, %v793
  %v858 = vadd.f32 %v470, %v794
  %v859 = vadd.f32 %v471, %v795
  %v860 = vadd.f32 %v472, %v796
  %v861 = vadd.f32 %v473, %v797
  %v862 = vadd.f32 %v474, %v798
  %v863 = vadd.f32 %v475, %v799
  %v864 = vadd.f32 %v476, %v800
  %v865 = vadd.f32 %v477, %v801
  %v866 = vadd.f32 %v478, %v802
  %867 = vset.pattern.permute.xlu0 2
  %868 = vperm.xlu0 %867, %v26
  %v869 = vpop.permute.xlu0 %868
  %871 = vset.pattern.permute.xlu0 2
  %872 = vperm.xlu0 %871, %v27
  %v873 = vpop.permute.xlu0 %872
  %875 = vset.pattern.permute.xlu0 2
  %876 = vperm.xlu0 %875, %v28
  %v877 = vpop.permute.xlu0 %876
  %879 = vset.pattern.permute.xlu0 2
  %880 = vperm.xlu0 %879, %v29
  %v881 = vpop.permute.xlu0 %880
  %883 = vset.pattern.permute.xlu0 2
  %884 = vperm.xlu0 %883, %v30
  %v885 = vpop.permute.xlu0 %884
  %887 = vset.pattern.permute.xlu0 2
  %888 = vperm.xlu0 %887, %v31
  %v889 = vpop.permute.xlu0 %888
  %891 = vset.pattern.permute.xlu0 2
  %892 = vperm.xlu0 %891, %v32
  %v893 = vpop.permute.xlu0 %892
  %895 = vset.pattern.permute.xlu0 2
  %896 = vperm.xlu0 %895, %v33
  %v897 = vpop.permute.xlu0 %896
  %899 = vset.pattern.permute.xlu0 2
  %900 = vperm.xlu0 %899, %v34
  %v901 = vpop.permute.xlu0 %900
  %903 = vset.pattern.permute.xlu0 2
  %904 = vperm.xlu0 %903, %v35
  %v905 = vpop.permute.xlu0 %904
  %907 = vset.pattern.permute.xlu0 2
  %908 = vperm.xlu0 %907, %v36
  %v909 = vpop.permute.xlu0 %908
  %911 = vset.pattern.permute.xlu0 2
  %912 = vperm.xlu0 %911, %v37
  %v913 = vpop.permute.xlu0 %912
  %915 = vset.pattern.permute.xlu0 2
  %916 = vperm.xlu0 %915, %v38
  %v917 = vpop.permute.xlu0 %916
  %919 = vset.pattern.permute.xlu0 2
  %920 = vperm.xlu0 %919, %v39
  %v921 = vpop.permute.xlu0 %920
  %923 = vset.pattern.permute.xlu0 2
  %924 = vperm.xlu0 %923, %v40
  %v925 = vpop.permute.xlu0 %924
  %927 = vset.pattern.permute.xlu0 2
  %928 = vperm.xlu0 %927, %v41
  %v929 = vpop.permute.xlu0 %928
  %931 = vset.pattern.permute.xlu0 2
  %932 = vperm.xlu0 %931, %v42
  %v933 = vpop.permute.xlu0 %932
  %935 = vset.pattern.permute.xlu0 2
  %936 = vperm.xlu0 %935, %v43
  %v937 = vpop.permute.xlu0 %936
  %939 = vset.pattern.permute.xlu0 2
  %940 = vperm.xlu0 %939, %v44
  %v941 = vpop.permute.xlu0 %940
  %943 = vset.pattern.permute.xlu0 2
  %944 = vperm.xlu0 %943, %v45
  %v945 = vpop.permute.xlu0 %944
  %947 = vset.pattern.permute.xlu0 2
  %948 = vperm.xlu0 %947, %v46
  %v949 = vpop.permute.xlu0 %948
  %951 = vset.pattern.permute.xlu0 2
  %952 = vperm.xlu0 %951, %v47
  %v953 = vpop.permute.xlu0 %952
  %955 = vset.pattern.permute.xlu0 2
  %956 = vperm.xlu0 %955, %v48
  %v957 = vpop.permute.xlu0 %956
  %959 = vset.pattern.permute.xlu0 2
  %960 = vperm.xlu0 %959, %v49
  %v961 = vpop.permute.xlu0 %960
  %963 = vset.pattern.permute.xlu0 2
  %964 = vperm.xlu0 %963, %v50
  %v965 = vpop.permute.xlu0 %964
  %967 = vset.pattern.permute.xlu0 2
  %968 = vperm.xlu0 %967, %v51
  %v969 = vpop.permute.xlu0 %968
  %971 = vset.pattern.permute.xlu0 2
  %972 = vperm.xlu0 %971, %v52
  %v973 = vpop.permute.xlu0 %972
  %975 = vset.pattern.permute.xlu0 2
  %976 = vperm.xlu0 %975, %v53
  %v977 = vpop.permute.xlu0 %976
  %979 = vset.pattern.permute.xlu0 2
  %980 = vperm.xlu0 %979, %v54
  %v981 = vpop.permute.xlu0 %980
  %983 = vset.pattern.permute.xlu0 2
  %984 = vperm.xlu0 %983, %v55
  %v985 = vpop.permute.xlu0 %984
  %987 = vset.pattern.permute.xlu0 2
  %988 = vperm.xlu0 %987, %v56
  %v989 = vpop.permute.xlu0 %988
  %991 = vset.pattern.permute.xlu0 2
  %992 = vperm.xlu0 %991, %v57
  %v993 = vpop.permute.xlu0 %992
  %995 = vset.pattern.permute.xlu0 2
  %996 = vperm.xlu0 %995, %v58
  %v997 = vpop.permute.xlu0 %996
  %999 = vset.pattern.permute.xlu0 2
  %1000 = vperm.xlu0 %999, %v59
  %v1001 = vpop.permute.xlu0 %1000
  %1003 = vset.pattern.permute.xlu0 2
  %1004 = vperm.xlu0 %1003, %v60
  %v1005 = vpop.permute.xlu0 %1004
  %1007 = vset.pattern.permute.xlu0 2
  %1008 = vperm.xlu0 %1007, %v61
  %v1009 = vpop.permute.xlu0 %1008
  %1011 = vset.pattern.permute.xlu0 2
  %1012 = vperm.xlu0 %1011, %v62
  %v1013 = vpop.permute.xlu0 %1012
  %1015 = vset.pattern.permute.xlu0 2
  %1016 = vperm.xlu0 %1015, %v63
  %v1017 = vpop.permute.xlu0 %1016
  %1019 = vset.pattern.permute.xlu0 2
  %1020 = vperm.xlu0 %1019, %v64
  %v1021 = vpop.permute.xlu0 %1020
  %1023 = vset.pattern.permute.xlu0 2
  %1024 = vperm.xlu0 %1023, %v65
  %v1025 = vpop.permute.xlu0 %1024
  %1027 = vset.pattern.permute.xlu0 2
  %1028 = vperm.xlu0 %1027, %v66
  %v1029 = vpop.permute.xlu0 %1028
  %1031 = vset.pattern.permute.xlu0 2
  %1032 = vperm.xlu0 %1031, %v67
  %v1033 = vpop.permute.xlu0 %1032
  %1035 = vset.pattern.permute.xlu0 2
  %1036 = vperm.xlu0 %1035, %v68
  %v1037 = vpop.permute.xlu0 %1036
  %1039 = vset.pattern.permute.xlu0 2
  %1040 = vperm.xlu0 %1039, %v69
  %v1041 = vpop.permute.xlu0 %1040
  %1043 = vset.pattern.permute.xlu0 2
  %1044 = vperm.xlu0 %1043, %v70
  %v1045 = vpop.permute.xlu0 %1044
  %1047 = vset.pattern.permute.xlu0 2
  %1048 = vperm.xlu0 %1047, %v71
  %v1049 = vpop.permute.xlu0 %1048
  %1051 = vset.pattern.permute.xlu0 2
  %1052 = vperm.xlu0 %1051, %v72
  %v1053 = vpop.permute.xlu0 %1052
  %1055 = vset.pattern.permute.xlu0 2
  %1056 = vperm.xlu0 %1055, %v73
  %v1057 = vpop.permute.xlu0 %1056
  %1059 = vset.pattern.permute.xlu0 2
  %1060 = vperm.xlu0 %1059, %v74
  %v1061 = vpop.permute.xlu0 %1060
  %1063 = vset.pattern.permute.xlu0 2
  %1064 = vperm.xlu0 %1063, %v75
  %v1065 = vpop.permute.xlu0 %1064
  %1067 = vset.pattern.permute.xlu0 2
  %1068 = vperm.xlu0 %1067, %v76
  %v1069 = vpop.permute.xlu0 %1068
  %1071 = vset.pattern.permute.xlu0 2
  %1072 = vperm.xlu0 %1071, %v77
  %v1073 = vpop.permute.xlu0 %1072
  %1075 = vset.pattern.permute.xlu0 2
  %1076 = vperm.xlu0 %1075, %v78
  %v1077 = vpop.permute.xlu0 %1076
  %1079 = vset.pattern.permute.xlu0 2
  %1080 = vperm.xlu0 %1079, %v79
  %v1081 = vpop.permute.xlu0 %1080
  %1083 = vset.pattern.permute.xlu0 2
  %1084 = vperm.xlu0 %1083, %v80
  %v1085 = vpop.permute.xlu0 %1084
  %1087 = vset.pattern.permute.xlu0 2
  %1088 = vperm.xlu0 %1087, %v81
  %v1089 = vpop.permute.xlu0 %1088
  %1091 = vset.pattern.permute.xlu0 2
  %1092 = vperm.xlu0 %1091, %v82
  %v1093 = vpop.permute.xlu0 %1092
  %1095 = vset.pattern.permute.xlu0 2
  %1096 = vperm.xlu0 %1095, %v83
  %v1097 = vpop.permute.xlu0 %1096
  %1099 = vset.pattern.permute.xlu0 2
  %1100 = vperm.xlu0 %1099, %v84
  %v1101 = vpop.permute.xlu0 %1100
  %1103 = vset.pattern.permute.xlu0 2
  %1104 = vperm.xlu0 %1103, %v85
  %v1105 = vpop.permute.xlu0 %1104
  %1107 = vset.pattern.permute.xlu0 2
  %1108 = vperm.xlu0 %1107, %v86
  %v1109 = vpop.permute.xlu0 %1108
  %1111 = vset.pattern.permute.xlu0 2
  %1112 = vperm.xlu0 %1111, %v87
  %v1113 = vpop.permute.xlu0 %1112
  %1115 = vset.pattern.permute.xlu0 2
  %1116 = vperm.xlu0 %1115, %v88
  %v1117 = vpop.permute.xlu0 %1116
  %1119 = vset.pattern.permute.xlu0 2
  %1120 = vperm.xlu0 %1119, %v89
  %v1121 = vpop.permute.xlu0 %1120
  %v1123 = vlaneseq
  %v1124 = vshrl.u32 %v1123, 7
  %v1125 = vsub.s32 2, %v1124
  %v1126 = vrot.slane %v90, %v1125
  %v1127 = vmul.f32 %v869, %v1126
  %v1128 = vmul.f32 %v873, %v1126
  %v1129 = vmul.f32 %v877, %v1126
  %v1130 = vmul.f32 %v881, %v1126
  %v1131 = vmul.f32 %v885, %v1126
  %v1132 = vmul.f32 %v889, %v1126
  %v1133 = vmul.f32 %v893, %v1126
  %v1134 = vmul.f32 %v897, %v1126
  %v1135 = vmul.f32 %v901, %v1126
  %v1136 = vmul.f32 %v905, %v1126
  %v1137 = vmul.f32 %v909, %v1126
  %v1138 = vmul.f32 %v913, %v1126
  %v1139 = vmul.f32 %v917, %v1126
  %v1140 = vmul.f32 %v921, %v1126
  %v1141 = vmul.f32 %v925, %v1126
  %v1142 = vmul.f32 %v929, %v1126
  %v1143 = vmul.f32 %v933, %v1126
  %v1144 = vmul.f32 %v937, %v1126
  %v1145 = vmul.f32 %v941, %v1126
  %v1146 = vmul.f32 %v945, %v1126
  %v1147 = vmul.f32 %v949, %v1126
  %v1148 = vmul.f32 %v953, %v1126
  %v1149 = vmul.f32 %v957, %v1126
  %v1150 = vmul.f32 %v961, %v1126
  %v1151 = vmul.f32 %v965, %v1126
  %v1152 = vmul.f32 %v969, %v1126
  %v1153 = vmul.f32 %v973, %v1126
  %v1154 = vmul.f32 %v977, %v1126
  %v1155 = vmul.f32 %v981, %v1126
  %v1156 = vmul.f32 %v985, %v1126
  %v1157 = vmul.f32 %v989, %v1126
  %v1158 = vmul.f32 %v993, %v1126
  %v1159 = vmul.f32 %v997, %v1126
  %v1160 = vmul.f32 %v1001, %v1126
  %v1161 = vmul.f32 %v1005, %v1126
  %v1162 = vmul.f32 %v1009, %v1126
  %v1163 = vmul.f32 %v1013, %v1126
  %v1164 = vmul.f32 %v1017, %v1126
  %v1165 = vmul.f32 %v1021, %v1126
  %v1166 = vmul.f32 %v1025, %v1126
  %v1167 = vmul.f32 %v1029, %v1126
  %v1168 = vmul.f32 %v1033, %v1126
  %v1169 = vmul.f32 %v1037, %v1126
  %v1170 = vmul.f32 %v1041, %v1126
  %v1171 = vmul.f32 %v1045, %v1126
  %v1172 = vmul.f32 %v1049, %v1126
  %v1173 = vmul.f32 %v1053, %v1126
  %v1174 = vmul.f32 %v1057, %v1126
  %v1175 = vmul.f32 %v1061, %v1126
  %v1176 = vmul.f32 %v1065, %v1126
  %v1177 = vmul.f32 %v1069, %v1126
  %v1178 = vmul.f32 %v1073, %v1126
  %v1179 = vmul.f32 %v1077, %v1126
  %v1180 = vmul.f32 %v1081, %v1126
  %v1181 = vmul.f32 %v1085, %v1126
  %v1182 = vmul.f32 %v1089, %v1126
  %v1183 = vmul.f32 %v1093, %v1126
  %v1184 = vmul.f32 %v1097, %v1126
  %v1185 = vmul.f32 %v1101, %v1126
  %v1186 = vmul.f32 %v1105, %v1126
  %v1187 = vmul.f32 %v1109, %v1126
  %v1188 = vmul.f32 %v1113, %v1126
  %v1189 = vmul.f32 %v1117, %v1126
  %v1190 = vmul.f32 %v1121, %v1126
  %v1191 = vadd.f32 %v803, %v1127
  %v1192 = vadd.f32 %v804, %v1128
  %v1193 = vadd.f32 %v805, %v1129
  %v1194 = vadd.f32 %v806, %v1130
  %v1195 = vadd.f32 %v807, %v1131
  %v1196 = vadd.f32 %v808, %v1132
  %v1197 = vadd.f32 %v809, %v1133
  %v1198 = vadd.f32 %v810, %v1134
  %v1199 = vadd.f32 %v811, %v1135
  %v1200 = vadd.f32 %v812, %v1136
  %v1201 = vadd.f32 %v813, %v1137
  %v1202 = vadd.f32 %v814, %v1138
  %v1203 = vadd.f32 %v815, %v1139
  %v1204 = vadd.f32 %v816, %v1140
  %v1205 = vadd.f32 %v817, %v1141
  %v1206 = vadd.f32 %v818, %v1142
  %v1207 = vadd.f32 %v819, %v1143
  %v1208 = vadd.f32 %v820, %v1144
  %v1209 = vadd.f32 %v821, %v1145
  %v1210 = vadd.f32 %v822, %v1146
  %v1211 = vadd.f32 %v823, %v1147
  %v1212 = vadd.f32 %v824, %v1148
  %v1213 = vadd.f32 %v825, %v1149
  %v1214 = vadd.f32 %v826, %v1150
  %v1215 = vadd.f32 %v827, %v1151
  %v1216 = vadd.f32 %v828, %v1152
  %v1217 = vadd.f32 %v829, %v1153
  %v1218 = vadd.f32 %v830, %v1154
  %v1219 = vadd.f32 %v831, %v1155
  %v1220 = vadd.f32 %v832, %v1156
  %v1221 = vadd.f32 %v833, %v1157
  %v1222 = vadd.f32 %v834, %v1158
  %v1223 = vadd.f32 %v835, %v1159
  %v1224 = vadd.f32 %v836, %v1160
  %v1225 = vadd.f32 %v837, %v1161
  %v1226 = vadd.f32 %v838, %v1162
  %v1227 = vadd.f32 %v839, %v1163
  %v1228 = vadd.f32 %v840, %v1164
  %v1229 = vadd.f32 %v841, %v1165
  %v1230 = vadd.f32 %v842, %v1166
  %v1231 = vadd.f32 %v843, %v1167
  %v1232 = vadd.f32 %v844, %v1168
  %v1233 = vadd.f32 %v845, %v1169
  %v1234 = vadd.f32 %v846, %v1170
  %v1235 = vadd.f32 %v847, %v1171
  %v1236 = vadd.f32 %v848, %v1172
  %v1237 = vadd.f32 %v849, %v1173
  %v1238 = vadd.f32 %v850, %v1174
  %v1239 = vadd.f32 %v851, %v1175
  %v1240 = vadd.f32 %v852, %v1176
  %v1241 = vadd.f32 %v853, %v1177
  %v1242 = vadd.f32 %v854, %v1178
  %v1243 = vadd.f32 %v855, %v1179
  %v1244 = vadd.f32 %v856, %v1180
  %v1245 = vadd.f32 %v857, %v1181
  %v1246 = vadd.f32 %v858, %v1182
  %v1247 = vadd.f32 %v859, %v1183
  %v1248 = vadd.f32 %v860, %v1184
  %v1249 = vadd.f32 %v861, %v1185
  %v1250 = vadd.f32 %v862, %v1186
  %v1251 = vadd.f32 %v863, %v1187
  %v1252 = vadd.f32 %v864, %v1188
  %v1253 = vadd.f32 %v865, %v1189
  %v1254 = vadd.f32 %v866, %v1190
  %v1255 = vld [vmem:[%s2] sm:$0x1]
  %v1257 = vlaneseq
  %v1258 = vshrl.u32 %v1257, 7
  %v1259 = vsub.s32 0, %v1258
  %v1260 = vrot.slane %v1255, %v1259
  %v1262 = vadd.f32 %v1191, %v1260
  %v1263 = vadd.f32 %v1192, %v1260
  %v1264 = vadd.f32 %v1193, %v1260
  %v1265 = vadd.f32 %v1194, %v1260
  %v1266 = vadd.f32 %v1195, %v1260
  %v1267 = vadd.f32 %v1196, %v1260
  %v1268 = vadd.f32 %v1197, %v1260
  %v1269 = vadd.f32 %v1198, %v1260
  %v1270 = vadd.f32 %v1199, %v1260
  %v1271 = vadd.f32 %v1200, %v1260
  %v1272 = vadd.f32 %v1201, %v1260
  %v1273 = vadd.f32 %v1202, %v1260
  %v1274 = vadd.f32 %v1203, %v1260
  %v1275 = vadd.f32 %v1204, %v1260
  %v1276 = vadd.f32 %v1205, %v1260
  %v1277 = vadd.f32 %v1206, %v1260
  %v1278 = vadd.f32 %v1207, %v1260
  %v1279 = vadd.f32 %v1208, %v1260
  %v1280 = vadd.f32 %v1209, %v1260
  %v1281 = vadd.f32 %v1210, %v1260
  %v1282 = vadd.f32 %v1211, %v1260
  %v1283 = vadd.f32 %v1212, %v1260
  %v1284 = vadd.f32 %v1213, %v1260
  %v1285 = vadd.f32 %v1214, %v1260
  %v1286 = vadd.f32 %v1215, %v1260
  %v1287 = vadd.f32 %v1216, %v1260
  %v1288 = vadd.f32 %v1217, %v1260
  %v1289 = vadd.f32 %v1218, %v1260
  %v1290 = vadd.f32 %v1219, %v1260
  %v1291 = vadd.f32 %v1220, %v1260
  %v1292 = vadd.f32 %v1221, %v1260
  %v1293 = vadd.f32 %v1222, %v1260
  %v1294 = vadd.f32 %v1223, %v1260
  %v1295 = vadd.f32 %v1224, %v1260
  %v1296 = vadd.f32 %v1225, %v1260
  %v1297 = vadd.f32 %v1226, %v1260
  %v1298 = vadd.f32 %v1227, %v1260
  %v1299 = vadd.f32 %v1228, %v1260
  %v1300 = vadd.f32 %v1229, %v1260
  %v1301 = vadd.f32 %v1230, %v1260
  %v1302 = vadd.f32 %v1231, %v1260
  %v1303 = vadd.f32 %v1232, %v1260
  %v1304 = vadd.f32 %v1233, %v1260
  %v1305 = vadd.f32 %v1234, %v1260
  %v1306 = vadd.f32 %v1235, %v1260
  %v1307 = vadd.f32 %v1236, %v1260
  %v1308 = vadd.f32 %v1237, %v1260
  %v1309 = vadd.f32 %v1238, %v1260
  %v1310 = vadd.f32 %v1239, %v1260
  %v1311 = vadd.f32 %v1240, %v1260
  %v1312 = vadd.f32 %v1241, %v1260
  %v1313 = vadd.f32 %v1242, %v1260
  %v1314 = vadd.f32 %v1243, %v1260
  %v1315 = vadd.f32 %v1244, %v1260
  %v1316 = vadd.f32 %v1245, %v1260
  %v1317 = vadd.f32 %v1246, %v1260
  %v1318 = vadd.f32 %v1247, %v1260
  %v1319 = vadd.f32 %v1248, %v1260
  %v1320 = vadd.f32 %v1249, %v1260
  %v1321 = vadd.f32 %v1250, %v1260
  %v1322 = vadd.f32 %v1251, %v1260
  %v1323 = vadd.f32 %v1252, %v1260
  %v1324 = vadd.f32 %v1253, %v1260
  %v1325 = vadd.f32 %v1254, %v1260
  %v1326 = vmax.f32 %v1262, 0.0
  %v1327 = vmax.f32 %v1263, 0.0
  %v1328 = vmax.f32 %v1264, 0.0
  %v1329 = vmax.f32 %v1265, 0.0
  %v1330 = vmax.f32 %v1266, 0.0
  %v1331 = vmax.f32 %v1267, 0.0
  %v1332 = vmax.f32 %v1268, 0.0
  %v1333 = vmax.f32 %v1269, 0.0
  %v1334 = vmax.f32 %v1270, 0.0
  %v1335 = vmax.f32 %v1271, 0.0
  %v1336 = vmax.f32 %v1272, 0.0
  %v1337 = vmax.f32 %v1273, 0.0
  %v1338 = vmax.f32 %v1274, 0.0
  %v1339 = vmax.f32 %v1275, 0.0
  %v1340 = vmax.f32 %v1276, 0.0
  %v1341 = vmax.f32 %v1277, 0.0
  %v1342 = vmax.f32 %v1278, 0.0
  %v1343 = vmax.f32 %v1279, 0.0
  %v1344 = vmax.f32 %v1280, 0.0
  %v1345 = vmax.f32 %v1281, 0.0
  %v1346 = vmax.f32 %v1282, 0.0
  %v1347 = vmax.f32 %v1283, 0.0
  %v1348 = vmax.f32 %v1284, 0.0
  %v1349 = vmax.f32 %v1285, 0.0
  %v1350 = vmax.f32 %v1286, 0.0
  %v1351 = vmax.f32 %v1287, 0.0
  %v1352 = vmax.f32 %v1288, 0.0
  %v1353 = vmax.f32 %v1289, 0.0
  %v1354 = vmax.f32 %v1290, 0.0
  %v1355 = vmax.f32 %v1291, 0.0
  %v1356 = vmax.f32 %v1292, 0.0
  %v1357 = vmax.f32 %v1293, 0.0
  %v1358 = vmax.f32 %v1294, 0.0
  %v1359 = vmax.f32 %v1295, 0.0
  %v1360 = vmax.f32 %v1296, 0.0
  %v1361 = vmax.f32 %v1297, 0.0
  %v1362 = vmax.f32 %v1298, 0.0
  %v1363 = vmax.f32 %v1299, 0.0
  %v1364 = vmax.f32 %v1300, 0.0
  %v1365 = vmax.f32 %v1301, 0.0
  %v1366 = vmax.f32 %v1302, 0.0
  %v1367 = vmax.f32 %v1303, 0.0
  %v1368 = vmax.f32 %v1304, 0.0
  %v1369 = vmax.f32 %v1305, 0.0
  %v1370 = vmax.f32 %v1306, 0.0
  %v1371 = vmax.f32 %v1307, 0.0
  %v1372 = vmax.f32 %v1308, 0.0
  %v1373 = vmax.f32 %v1309, 0.0
  %v1374 = vmax.f32 %v1310, 0.0
  %v1375 = vmax.f32 %v1311, 0.0
  %v1376 = vmax.f32 %v1312, 0.0
  %v1377 = vmax.f32 %v1313, 0.0
  %v1378 = vmax.f32 %v1314, 0.0
  %v1379 = vmax.f32 %v1315, 0.0
  %v1380 = vmax.f32 %v1316, 0.0
  %v1381 = vmax.f32 %v1317, 0.0
  %v1382 = vmax.f32 %v1318, 0.0
  %v1383 = vmax.f32 %v1319, 0.0
  %v1384 = vmax.f32 %v1320, 0.0
  %v1385 = vmax.f32 %v1321, 0.0
  %v1386 = vmax.f32 %v1322, 0.0
  %v1387 = vmax.f32 %v1323, 0.0
  %v1388 = vmax.f32 %v1324, 0.0
  %v1389 = vmax.f32 %v1325, 0.0
  %v1390 = vld [vmem:[%s3] sm:$0xff]
  %v1391 = vld [vmem:[%s3 + $0x8] sm:$0xff]
  %v1392 = vld [vmem:[%s3 + $0x10] sm:$0xff]
  %v1393 = vld [vmem:[%s3 + $0x18] sm:$0xff]
  %v1394 = vld [vmem:[%s3 + $0x20] sm:$0xff]
  %v1395 = vld [vmem:[%s3 + $0x28] sm:$0xff]
  %v1396 = vld [vmem:[%s3 + $0x30] sm:$0xff]
  %v1397 = vld [vmem:[%s3 + $0x38] sm:$0xff]
  %v1398 = vld [vmem:[%s4] sm:$0x1]
  %v1400 = vlaneseq
  %v1401 = vshrl.u32 %v1400, 7
  %v1402 = vsub.s32 0, %v1401
  %v1403 = vrot.slane %v1398, %v1402
  %vm1405 = vcmask 523264
  %v1407 = vsel %vm1405, %v1326, 0
  %v1410 = vsel %vm1405, %v1327, 0
  %v1413 = vsel %vm1405, %v1328, 0
  %v1416 = vsel %vm1405, %v1329, 0
  %v1419 = vsel %vm1405, %v1330, 0
  %v1422 = vsel %vm1405, %v1331, 0
  %v1425 = vsel %vm1405, %v1332, 0
  %v1428 = vsel %vm1405, %v1333, 0
  %v1431 = vsel %vm1405, %v1334, 0
  %v1434 = vsel %vm1405, %v1335, 0
  %v1437 = vsel %vm1405, %v1336, 0
  %v1440 = vsel %vm1405, %v1337, 0
  %v1443 = vsel %vm1405, %v1338, 0
  %v1446 = vsel %vm1405, %v1339, 0
  %v1449 = vsel %vm1405, %v1340, 0
  %v1452 = vsel %vm1405, %v1341, 0
  %v1455 = vsel %vm1405, %v1342, 0
  %v1458 = vsel %vm1405, %v1343, 0
  %v1461 = vsel %vm1405, %v1344, 0
  %v1464 = vsel %vm1405, %v1345, 0
  %v1467 = vsel %vm1405, %v1346, 0
  %v1470 = vsel %vm1405, %v1347, 0
  %v1473 = vsel %vm1405, %v1348, 0
  %v1476 = vsel %vm1405, %v1349, 0
  %v1479 = vsel %vm1405, %v1350, 0
  %v1482 = vsel %vm1405, %v1351, 0
  %v1485 = vsel %vm1405, %v1352, 0
  %v1488 = vsel %vm1405, %v1353, 0
  %v1491 = vsel %vm1405, %v1354, 0
  %v1494 = vsel %vm1405, %v1355, 0
  %v1497 = vsel %vm1405, %v1356, 0
  %v1500 = vsel %vm1405, %v1357, 0
  %v1503 = vsel %vm1405, %v1358, 0
  %v1506 = vsel %vm1405, %v1359, 0
  %v1509 = vsel %vm1405, %v1360, 0
  %v1512 = vsel %vm1405, %v1361, 0
  %v1515 = vsel %vm1405, %v1362, 0
  %v1518 = vsel %vm1405, %v1363, 0
  %v1521 = vsel %vm1405, %v1364, 0
  %v1524 = vsel %vm1405, %v1365, 0
  %v1527 = vsel %vm1405, %v1366, 0
  %v1530 = vsel %vm1405, %v1367, 0
  %v1533 = vsel %vm1405, %v1368, 0
  %v1536 = vsel %vm1405, %v1369, 0
  %v1539 = vsel %vm1405, %v1370, 0
  %v1542 = vsel %vm1405, %v1371, 0
  %v1545 = vsel %vm1405, %v1372, 0
  %v1548 = vsel %vm1405, %v1373, 0
  %v1551 = vsel %vm1405, %v1374, 0
  %v1554 = vsel %vm1405, %v1375, 0
  %v1557 = vsel %vm1405, %v1376, 0
  %v1560 = vsel %vm1405, %v1377, 0
  %v1563 = vsel %vm1405, %v1378, 0
  %v1566 = vsel %vm1405, %v1379, 0
  %v1569 = vsel %vm1405, %v1380, 0
  %v1572 = vsel %vm1405, %v1381, 0
  %v1575 = vsel %vm1405, %v1382, 0
  %v1578 = vsel %vm1405, %v1383, 0
  %v1581 = vsel %vm1405, %v1384, 0
  %v1584 = vsel %vm1405, %v1385, 0
  %v1587 = vsel %vm1405, %v1386, 0
  %v1590 = vsel %vm1405, %v1387, 0
  %v1593 = vsel %vm1405, %v1388, 0
  %v1596 = vsel %vm1405, %v1389, 0
  %1598 = vmatprep.subr.mxu0 0.0
  %1599 = vmatpush1.msra.mxu0 %v1390
  %1600 = vmatprep.subr.mxu0 0.0
  %1601 = vmatpush1.msra.mxu0 %v1391
  %1602 = vmatprep.subr.mxu0 0.0
  %1603 = vmatpush1.msra.mxu0 %v1392
  %1604 = vmatprep.subr.mxu0 0.0
  %1605 = vmatpush1.msra.mxu0 %v1393
  %1606 = vmatprep.subr.mxu0 0.0
  %1607 = vmatpush1.msra.mxu0 %v1394
  %1608 = vmatprep.subr.mxu0 0.0
  %1609 = vmatpush1.msra.mxu0 %v1395
  %1610 = vmatprep.subr.mxu0 0.0
  %1611 = vmatpush1.msra.mxu0 %v1396
  %1612 = vmatprep.subr.mxu0 0.0
  %1613 = vmatpush1.msra.mxu0 %v1397
  %1614 = vmatprep.subr.mxu0 0.0
  %1615 = vmatpush1.msra.mxu0 0.0
  %1616 = vmatprep.subr.mxu0 0.0
  %1617 = vmatpush1.msra.mxu0 0.0
  %1618 = vmatprep.subr.mxu0 0.0
  %1619 = vmatpush1.msra.mxu0 0.0
  %1620 = vmatprep.subr.mxu0 0.0
  %1621 = vmatpush1.msra.mxu0 0.0
  %1622 = vmatprep.subr.mxu0 0.0
  %1623 = vmatpush1.msra.mxu0 0.0
  %1624 = vmatprep.subr.mxu0 0.0
  %1625 = vmatpush1.msra.mxu0 0.0
  %1626 = vmatprep.subr.mxu0 0.0
  %1627 = vmatpush1.msra.mxu0 0.0
  %1628 = vmatprep.subr.mxu0 0.0
  %1629 = vmatpush1.msra.mxu0 0.0
  %1630 = vmatprep.subr.mxu0 0.0
  %1631 = vmatpush1.msra.mxu0 0.0
  %1632 = vmatprep.subr.mxu0 0.0
  %1633 = vmatpush1.msra.mxu0 0.0
  %1634 = vmatprep.subr.mxu0 0.0
  %1635 = vmatpush1.msra.mxu0 0.0
  %1636 = vmatprep.subr.mxu0 0.0
  %1637 = vmatpush1.msra.mxu0 0.0
  %1638 = vmatprep.subr.mxu0 0.0
  %1639 = vmatpush1.msra.mxu0 0.0
  %1640 = vmatprep.subr.mxu0 0.0
  %1641 = vmatpush1.msra.mxu0 0.0
  %1642 = vmatprep.subr.mxu0 0.0
  %1643 = vmatpush1.msra.mxu0 0.0
  %1644 = vmatprep.subr.mxu0 0.0
  %1645 = vmatpush1.msra.mxu0 0.0
  %1646 = vmatprep.subr.mxu0 0.0
  %1647 = vmatpush1.msra.mxu0 0.0
  %1648 = vmatprep.subr.mxu0 0.0
  %1649 = vmatpush1.msra.mxu0 0.0
  %1650 = vmatprep.subr.mxu0 0.0
  %1651 = vmatpush1.msra.mxu0 0.0
  %1652 = vmatprep.subr.mxu0 0.0
  %1653 = vmatpush1.msra.mxu0 0.0
  %1654 = vmatprep.subr.mxu0 0.0
  %1655 = vmatpush1.msra.mxu0 0.0
  %1656 = vmatprep.subr.mxu0 0.0
  %1657 = vmatpush1.msra.mxu0 0.0
  %1658 = vmatprep.subr.mxu0 0.0
  %1659 = vmatpush1.msra.mxu0 0.0
  %1660 = vmatprep.subr.mxu0 0.0
  %1661 = vmatpush1.msra.mxu0 0.0
  %1662 = vmatprep.mubr.f32.mxu0 0.0
  %1663 = vmatmul.mubr.f32.gmra.mrb[0].mxu0 %v1407
  %v1664 = vpop.f32.mrb[0].mxu0
  %v1665 = vadd.f32 %v1403, %v1664
  %v1666 = vpop.f32.mrb[0].mxu0
  %1667 = vmatprep.mubr.f32.mxu0 0.0
  %1668 = vmatmul.mubr.f32.gmra.mrb[0].mxu0 %v1410
  %v1669 = vpop.f32.mrb[0].mxu0
  %v1670 = vadd.f32 %v1403, %v1669
  %v1671 = vpop.f32.mrb[0].mxu0
  %1672 = vmatprep.mubr.f32.mxu0 0.0
  %1673 = vmatmul.mubr.f32.gmra.mrb[0].mxu0 %v1413
  %v1674 = vpop.f32.mrb[0].mxu0
  %v1675 = vadd.f32 %v1403, %v1674
  %v1676 = vpop.f32.mrb[0].mxu0
  %1677 = vmatprep.mubr.f32.mxu0 0.0
  %1678 = vmatmul.mubr.f32.gmra.mrb[0].mxu0 %v1416
  %v1679 = vpop.f32.mrb[0].mxu0
  %v1680 = vadd.f32 %v1403, %v1679
  %v1681 = vpop.f32.mrb[0].mxu0
  %1682 = vmatprep.mubr.f32.mxu0 0.0
  %1683 = vmatmul.mubr.f32.gmra.mrb[0].mxu0 %v1419
  %v1684 = vpop.f32.mrb[0].mxu0
  %v1685 = vadd.f32 %v1403, %v1684
  %v1686 = vpop.f32.mrb[0].mxu0
  %1687 = vmatprep.mubr.f32.mxu0 0.0
  %1688 = vmatmul.mubr.f32.gmra.mrb[0].mxu0 %v1422
  %v1689 = vpop.f32.mrb[0].mxu0
  %v1690 = vadd.f32 %v1403, %v1689
  %v1691 = vpop.f32.mrb[0].mxu0
  %1692 = vmatprep.mubr.f32.mxu0 0.0
  %1693 = vmatmul.mubr.f32.gmra.mrb[0].mxu0 %v1425
  %v1694 = vpop.f32.mrb[0].mxu0
  %v1695 = vadd.f32 %v1403, %v1694
  %v1696 = vpop.f32.mrb[0].mxu0
  %1697 = vmatprep.mubr.f32.mxu0 0.0
  %1698 = vmatmul.mubr.f32.gmra.mrb[0].mxu0 %v1428
  %v1699 = vpop.f32.mrb[0].mxu0
  %v1700 = vadd.f32 %v1403, %v1699
  %v1701 = vpop.f32.mrb[0].mxu0
  %1702 = vmatprep.mubr.f32.mxu0 0.0
  %1703 = vmatmul.mubr.f32.gmra.mrb[0].mxu0 %v1431
  %v1704 = vpop.f32.mrb[0].mxu0
  %v1705 = vadd.f32 %v1403, %v1704
  %v1706 = vpop.f32.mrb[0].mxu0
  %1707 = vmatprep.mubr.f32.mxu0 0.0
  %1708 = vmatmul.mubr.f32.gmra.mrb[0].mxu0 %v1434
  %v1709 = vpop.f32.mrb[0].mxu0
  %v1710 = vadd.f32 %v1403, %v1709
  %v1711 = vpop.f32.mrb[0].mxu0
  %1712 = vmatprep.mubr.f32.mxu0 0.0
  %1713 = vmatmul.mubr.f32.gmra.mrb[0].mxu0 %v1437
  %v1714 = vpop.f32.mrb[0].mxu0
  %v1715 = vadd.f32 %v1403, %v1714
  %v1716 = vpop.f32.mrb[0].mxu0
  %1717 = vmatprep.mubr.f32.mxu0 0.0
  %1718 = vmatmul.mubr.f32.gmra.mrb[0].mxu0 %v1440
  %v1719 = vpop.f32.mrb[0].mxu0
  %v1720 = vadd.f32 %v1403, %v1719
  %v1721 = vpop.f32.mrb[0].mxu0
  %1722 = vmatprep.mubr.f32.mxu0 0.0
  %1723 = vmatmul.mubr.f32.gmra.mrb[0].mxu0 %v1443
  %v1724 = vpop.f32.mrb[0].mxu0
  %v1725 = vadd.f32 %v1403, %v1724
  %v1726 = vpop.f32.mrb[0].mxu0
  %1727 = vmatprep.mubr.f32.mxu0 0.0
  %1728 = vmatmul.mubr.f32.gmra.mrb[0].mxu0 %v1446
  %v1729 = vpop.f32.mrb[0].mxu0
  %v1730 = vadd.f32 %v1403, %v1729
  %v1731 = vpop.f32.mrb[0].mxu0
  %1732 = vmatprep.mubr.f32.mxu0 0.0
  %1733 = vmatmul.mubr.f32.gmra.mrb[0].mxu0 %v1449
  %v1734 = vpop.f32.mrb[0].mxu0
  %v1735 = vadd.f32 %v1403, %v1734
  %v1736 = vpop.f32.mrb[0].mxu0
  %1737 = vmatprep.mubr.f32.mxu0 0.0
  %1738 = vmatmul.mubr.f32.gmra.mrb[0].mxu0 %v1452
  %v1739 = vpop.f32.mrb[0].mxu0
  %v1740 = vadd.f32 %v1403, %v1739
  %v1741 = vpop.f32.mrb[0].mxu0
  %1742 = vmatprep.mubr.f32.mxu0 0.0
  %1743 = vmatmul.mubr.f32.gmra.mrb[0].mxu0 %v1455
  %v1744 = vpop.f32.mrb[0].mxu0
  %v1745 = vadd.f32 %v1403, %v1744
  %v1746 = vpop.f32.mrb[0].mxu0
  %1747 = vmatprep.mubr.f32.mxu0 0.0
  %1748 = vmatmul.mubr.f32.gmra.mrb[0].mxu0 %v1458
  %v1749 = vpop.f32.mrb[0].mxu0
  %v1750 = vadd.f32 %v1403, %v1749
  %v1751 = vpop.f32.mrb[0].mxu0
  %1752 = vmatprep.mubr.f32.mxu0 0.0
  %1753 = vmatmul.mubr.f32.gmra.mrb[0].mxu0 %v1461
  %v1754 = vpop.f32.mrb[0].mxu0
  %v1755 = vadd.f32 %v1403, %v1754
  %v1756 = vpop.f32.mrb[0].mxu0
  %1757 = vmatprep.mubr.f32.mxu0 0.0
  %1758 = vmatmul.mubr.f32.gmra.mrb[0].mxu0 %v1464
  %v1759 = vpop.f32.mrb[0].mxu0
  %v1760 = vadd.f32 %v1403, %v1759
  %v1761 = vpop.f32.mrb[0].mxu0
  %1762 = vmatprep.mubr.f32.mxu0 0.0
  %1763 = vmatmul.mubr.f32.gmra.mrb[0].mxu0 %v1467
  %v1764 = vpop.f32.mrb[0].mxu0
  %v1765 = vadd.f32 %v1403, %v1764
  %v1766 = vpop.f32.mrb[0].mxu0
  %1767 = vmatprep.mubr.f32.mxu0 0.0
  %1768 = vmatmul.mubr.f32.gmra.mrb[0].mxu0 %v1470
  %v1769 = vpop.f32.mrb[0].mxu0
  %v1770 = vadd.f32 %v1403, %v1769
  %v1771 = vpop.f32.mrb[0].mxu0
  %1772 = vmatprep.mubr.f32.mxu0 0.0
  %1773 = vmatmul.mubr.f32.gmra.mrb[0].mxu0 %v1473
  %v1774 = vpop.f32.mrb[0].mxu0
  %v1775 = vadd.f32 %v1403, %v1774
  %v1776 = vpop.f32.mrb[0].mxu0
  %1777 = vmatprep.mubr.f32.mxu0 0.0
  %1778 = vmatmul.mubr.f32.gmra.mrb[0].mxu0 %v1476
  %v1779 = vpop.f32.mrb[0].mxu0
  %v1780 = vadd.f32 %v1403, %v1779
  %v1781 = vpop.f32.mrb[0].mxu0
  %1782 = vmatprep.mubr.f32.mxu0 0.0
  %1783 = vmatmul.mubr.f32.gmra.mrb[0].mxu0 %v1479
  %v1784 = vpop.f32.mrb[0].mxu0
  %v1785 = vadd.f32 %v1403, %v1784
  %v1786 = vpop.f32.mrb[0].mxu0
  %1787 = vmatprep.mubr.f32.mxu0 0.0
  %1788 = vmatmul.mubr.f32.gmra.mrb[0].mxu0 %v1482
  %v1789 = vpop.f32.mrb[0].mxu0
  %v1790 = vadd.f32 %v1403, %v1789
  %v1791 = vpop.f32.mrb[0].mxu0
  %1792 = vmatprep.mubr.f32.mxu0 0.0
  %1793 = vmatmul.mubr.f32.gmra.mrb[0].mxu0 %v1485
  %v1794 = vpop.f32.mrb[0].mxu0
  %v1795 = vadd.f32 %v1403, %v1794
  %v1796 = vpop.f32.mrb[0].mxu0
  %1797 = vmatprep.mubr.f32.mxu0 0.0
  %1798 = vmatmul.mubr.f32.gmra.mrb[0].mxu0 %v1488
  %v1799 = vpop.f32.mrb[0].mxu0
  %v1800 = vadd.f32 %v1403, %v1799
  %v1801 = vpop.f32.mrb[0].mxu0
  %1802 = vmatprep.mubr.f32.mxu0 0.0
  %1803 = vmatmul.mubr.f32.gmra.mrb[0].mxu0 %v1491
  %v1804 = vpop.f32.mrb[0].mxu0
  %v1805 = vadd.f32 %v1403, %v1804
  %v1806 = vpop.f32.mrb[0].mxu0
  %1807 = vmatprep.mubr.f32.mxu0 0.0
  %1808 = vmatmul.mubr.f32.gmra.mrb[0].mxu0 %v1494
  %v1809 = vpop.f32.mrb[0].mxu0
  %v1810 = vadd.f32 %v1403, %v1809
  %v1811 = vpop.f32.mrb[0].mxu0
  %1812 = vmatprep.mubr.f32.mxu0 0.0
  %1813 = vmatmul.mubr.f32.gmra.mrb[0].mxu0 %v1497
  %v1814 = vpop.f32.mrb[0].mxu0
  %v1815 = vadd.f32 %v1403, %v1814
  %v1816 = vpop.f32.mrb[0].mxu0
  %1817 = vmatprep.mubr.f32.mxu0 0.0
  %1818 = vmatmul.mubr.f32.gmra.mrb[0].mxu0 %v1500
  %v1819 = vpop.f32.mrb[0].mxu0
  %v1820 = vadd.f32 %v1403, %v1819
  %v1821 = vpop.f32.mrb[0].mxu0
  %1822 = vmatprep.mubr.f32.mxu0 0.0
  %1823 = vmatmul.mubr.f32.gmra.mrb[0].mxu0 %v1503
  %v1824 = vpop.f32.mrb[0].mxu0
  %v1825 = vadd.f32 %v1403, %v1824
  %v1826 = vpop.f32.mrb[0].mxu0
  %1827 = vmatprep.mubr.f32.mxu0 0.0
  %1828 = vmatmul.mubr.f32.gmra.mrb[0].mxu0 %v1506
  %v1829 = vpop.f32.mrb[0].mxu0
  %v1830 = vadd.f32 %v1403, %v1829
  %v1831 = vpop.f32.mrb[0].mxu0
  %1832 = vmatprep.mubr.f32.mxu0 0.0
  %1833 = vmatmul.mubr.f32.gmra.mrb[0].mxu0 %v1509
  %v1834 = vpop.f32.mrb[0].mxu0
  %v1835 = vadd.f32 %v1403, %v1834
  %v1836 = vpop.f32.mrb[0].mxu0
  %1837 = vmatprep.mubr.f32.mxu0 0.0
  %1838 = vmatmul.mubr.f32.gmra.mrb[0].mxu0 %v1512
  %v1839 = vpop.f32.mrb[0].mxu0
  %v1840 = vadd.f32 %v1403, %v1839
  %v1841 = vpop.f32.mrb[0].mxu0
  %1842 = vmatprep.mubr.f32.mxu0 0.0
  %1843 = vmatmul.mubr.f32.gmra.mrb[0].mxu0 %v1515
  %v1844 = vpop.f32.mrb[0].mxu0
  %v1845 = vadd.f32 %v1403, %v1844
  %v1846 = vpop.f32.mrb[0].mxu0
  %1847 = vmatprep.mubr.f32.mxu0 0.0
  %1848 = vmatmul.mubr.f32.gmra.mrb[0].mxu0 %v1518
  %v1849 = vpop.f32.mrb[0].mxu0
  %v1850 = vadd.f32 %v1403, %v1849
  %v1851 = vpop.f32.mrb[0].mxu0
  %1852 = vmatprep.mubr.f32.mxu0 0.0
  %1853 = vmatmul.mubr.f32.gmra.mrb[0].mxu0 %v1521
  %v1854 = vpop.f32.mrb[0].mxu0
  %v1855 = vadd.f32 %v1403, %v1854
  %v1856 = vpop.f32.mrb[0].mxu0
  %1857 = vmatprep.mubr.f32.mxu0 0.0
  %1858 = vmatmul.mubr.f32.gmra.mrb[0].mxu0 %v1524
  %v1859 = vpop.f32.mrb[0].mxu0
  %v1860 = vadd.f32 %v1403, %v1859
  %v1861 = vpop.f32.mrb[0].mxu0
  %1862 = vmatprep.mubr.f32.mxu0 0.0
  %1863 = vmatmul.mubr.f32.gmra.mrb[0].mxu0 %v1527
  %v1864 = vpop.f32.mrb[0].mxu0
  %v1865 = vadd.f32 %v1403, %v1864
  %v1866 = vpop.f32.mrb[0].mxu0
  %1867 = vmatprep.mubr.f32.mxu0 0.0
  %1868 = vmatmul.mubr.f32.gmra.mrb[0].mxu0 %v1530
  %v1869 = vpop.f32.mrb[0].mxu0
  %v1870 = vadd.f32 %v1403, %v1869
  %v1871 = vpop.f32.mrb[0].mxu0
  %1872 = vmatprep.mubr.f32.mxu0 0.0
  %1873 = vmatmul.mubr.f32.gmra.mrb[0].mxu0 %v1533
  %v1874 = vpop.f32.mrb[0].mxu0
  %v1875 = vadd.f32 %v1403, %v1874
  %v1876 = vpop.f32.mrb[0].mxu0
  %1877 = vmatprep.mubr.f32.mxu0 0.0
  %1878 = vmatmul.mubr.f32.gmra.mrb[0].mxu0 %v1536
  %v1879 = vpop.f32.mrb[0].mxu0
  %v1880 = vadd.f32 %v1403, %v1879
  %v1881 = vpop.f32.mrb[0].mxu0
  %1882 = vmatprep.mubr.f32.mxu0 0.0
  %1883 = vmatmul.mubr.f32.gmra.mrb[0].mxu0 %v1539
  %v1884 = vpop.f32.mrb[0].mxu0
  %v1885 = vadd.f32 %v1403, %v1884
  %v1886 = vpop.f32.mrb[0].mxu0
  %1887 = vmatprep.mubr.f32.mxu0 0.0
  %1888 = vmatmul.mubr.f32.gmra.mrb[0].mxu0 %v1542
  %v1889 = vpop.f32.mrb[0].mxu0
  %v1890 = vadd.f32 %v1403, %v1889
  %v1891 = vpop.f32.mrb[0].mxu0
  %1892 = vmatprep.mubr.f32.mxu0 0.0
  %1893 = vmatmul.mubr.f32.gmra.mrb[0].mxu0 %v1545
  %v1894 = vpop.f32.mrb[0].mxu0
  %v1895 = vadd.f32 %v1403, %v1894
  %v1896 = vpop.f32.mrb[0].mxu0
  %1897 = vmatprep.mubr.f32.mxu0 0.0
  %1898 = vmatmul.mubr.f32.gmra.mrb[0].mxu0 %v1548
  %v1899 = vpop.f32.mrb[0].mxu0
  %v1900 = vadd.f32 %v1403, %v1899
  %v1901 = vpop.f32.mrb[0].mxu0
  %1902 = vmatprep.mubr.f32.mxu0 0.0
  %1903 = vmatmul.mubr.f32.gmra.mrb[0].mxu0 %v1551
  %v1904 = vpop.f32.mrb[0].mxu0
  %v1905 = vadd.f32 %v1403, %v1904
  %v1906 = vpop.f32.mrb[0].mxu0
  %1907 = vmatprep.mubr.f32.mxu0 0.0
  %1908 = vmatmul.mubr.f32.gmra.mrb[0].mxu0 %v1554
  %v1909 = vpop.f32.mrb[0].mxu0
  %v1910 = vadd.f32 %v1403, %v1909
  %v1911 = vpop.f32.mrb[0].mxu0
  %1912 = vmatprep.mubr.f32.mxu0 0.0
  %1913 = vmatmul.mubr.f32.gmra.mrb[0].mxu0 %v1557
  %v1914 = vpop.f32.mrb[0].mxu0
  %v1915 = vadd.f32 %v1403, %v1914
  %v1916 = vpop.f32.mrb[0].mxu0
  %1917 = vmatprep.mubr.f32.mxu0 0.0
  %1918 = vmatmul.mubr.f32.gmra.mrb[0].mxu0 %v1560
  %v1919 = vpop.f32.mrb[0].mxu0
  %v1920 = vadd.f32 %v1403, %v1919
  %v1921 = vpop.f32.mrb[0].mxu0
  %1922 = vmatprep.mubr.f32.mxu0 0.0
  %1923 = vmatmul.mubr.f32.gmra.mrb[0].mxu0 %v1563
  %v1924 = vpop.f32.mrb[0].mxu0
  %v1925 = vadd.f32 %v1403, %v1924
  %v1926 = vpop.f32.mrb[0].mxu0
  %1927 = vmatprep.mubr.f32.mxu0 0.0
  %1928 = vmatmul.mubr.f32.gmra.mrb[0].mxu0 %v1566
  %v1929 = vpop.f32.mrb[0].mxu0
  %v1930 = vadd.f32 %v1403, %v1929
  %v1931 = vpop.f32.mrb[0].mxu0
  %1932 = vmatprep.mubr.f32.mxu0 0.0
  %1933 = vmatmul.mubr.f32.gmra.mrb[0].mxu0 %v1569
  %v1934 = vpop.f32.mrb[0].mxu0
  %v1935 = vadd.f32 %v1403, %v1934
  %v1936 = vpop.f32.mrb[0].mxu0
  %1937 = vmatprep.mubr.f32.mxu0 0.0
  %1938 = vmatmul.mubr.f32.gmra.mrb[0].mxu0 %v1572
  %v1939 = vpop.f32.mrb[0].mxu0
  %v1940 = vadd.f32 %v1403, %v1939
  %v1941 = vpop.f32.mrb[0].mxu0
  %1942 = vmatprep.mubr.f32.mxu0 0.0
  %1943 = vmatmul.mubr.f32.gmra.mrb[0].mxu0 %v1575
  %v1944 = vpop.f32.mrb[0].mxu0
  %v1945 = vadd.f32 %v1403, %v1944
  %v1946 = vpop.f32.mrb[0].mxu0
  %1947 = vmatprep.mubr.f32.mxu0 0.0
  %1948 = vmatmul.mubr.f32.gmra.mrb[0].mxu0 %v1578
  %v1949 = vpop.f32.mrb[0].mxu0
  %v1950 = vadd.f32 %v1403, %v1949
  %v1951 = vpop.f32.mrb[0].mxu0
  %1952 = vmatprep.mubr.f32.mxu0 0.0
  %1953 = vmatmul.mubr.f32.gmra.mrb[0].mxu0 %v1581
  %v1954 = vpop.f32.mrb[0].mxu0
  %v1955 = vadd.f32 %v1403, %v1954
  %v1956 = vpop.f32.mrb[0].mxu0
  %1957 = vmatprep.mubr.f32.mxu0 0.0
  %1958 = vmatmul.mubr.f32.gmra.mrb[0].mxu0 %v1584
  %v1959 = vpop.f32.mrb[0].mxu0
  %v1960 = vadd.f32 %v1403, %v1959
  %v1961 = vpop.f32.mrb[0].mxu0
  %1962 = vmatprep.mubr.f32.mxu0 0.0
  %1963 = vmatmul.mubr.f32.gmra.mrb[0].mxu0 %v1587
  %v1964 = vpop.f32.mrb[0].mxu0
  %v1965 = vadd.f32 %v1403, %v1964
  %v1966 = vpop.f32.mrb[0].mxu0
  %1967 = vmatprep.mubr.f32.mxu0 0.0
  %1968 = vmatmul.mubr.f32.gmra.mrb[0].mxu0 %v1590
  %v1969 = vpop.f32.mrb[0].mxu0
  %v1970 = vadd.f32 %v1403, %v1969
  %v1971 = vpop.f32.mrb[0].mxu0
  %1972 = vmatprep.mubr.f32.mxu0 0.0
  %1973 = vmatmul.mubr.f32.gmra.mrb[0].mxu0 %v1593
  %v1974 = vpop.f32.mrb[0].mxu0
  %v1975 = vadd.f32 %v1403, %v1974
  %v1976 = vpop.f32.mrb[0].mxu0
  %1977 = vmatprep.mubr.f32.mxu0 0.0
  %1978 = vmatmul.mubr.f32.gmra.mrb[0].mxu0 %v1596
  %v1979 = vpop.f32.mrb[0].mxu0
  %v1980 = vadd.f32 %v1403, %v1979
  %v1981 = vpop.f32.mrb[0].mxu0
  %1982 = vdwg.mxu0
  %v1983 = vmax.f32 %v1665, 0.0
  %v1984 = vmax.f32 %v1670, 0.0
  %v1985 = vmax.f32 %v1675, 0.0
  %v1986 = vmax.f32 %v1680, 0.0
  %v1987 = vmax.f32 %v1685, 0.0
  %v1988 = vmax.f32 %v1690, 0.0
  %v1989 = vmax.f32 %v1695, 0.0
  %v1990 = vmax.f32 %v1700, 0.0
  %v1991 = vmax.f32 %v1705, 0.0
  %v1992 = vmax.f32 %v1710, 0.0
  %v1993 = vmax.f32 %v1715, 0.0
  %v1994 = vmax.f32 %v1720, 0.0
  %v1995 = vmax.f32 %v1725, 0.0
  %v1996 = vmax.f32 %v1730, 0.0
  %v1997 = vmax.f32 %v1735, 0.0
  %v1998 = vmax.f32 %v1740, 0.0
  %v1999 = vmax.f32 %v1745, 0.0
  %v2000 = vmax.f32 %v1750, 0.0
  %v2001 = vmax.f32 %v1755, 0.0
  %v2002 = vmax.f32 %v1760, 0.0
  %v2003 = vmax.f32 %v1765, 0.0
  %v2004 = vmax.f32 %v1770, 0.0
  %v2005 = vmax.f32 %v1775, 0.0
  %v2006 = vmax.f32 %v1780, 0.0
  %v2007 = vmax.f32 %v1785, 0.0
  %v2008 = vmax.f32 %v1790, 0.0
  %v2009 = vmax.f32 %v1795, 0.0
  %v2010 = vmax.f32 %v1800, 0.0
  %v2011 = vmax.f32 %v1805, 0.0
  %v2012 = vmax.f32 %v1810, 0.0
  %v2013 = vmax.f32 %v1815, 0.0
  %v2014 = vmax.f32 %v1820, 0.0
  %v2015 = vmax.f32 %v1825, 0.0
  %v2016 = vmax.f32 %v1830, 0.0
  %v2017 = vmax.f32 %v1835, 0.0
  %v2018 = vmax.f32 %v1840, 0.0
  %v2019 = vmax.f32 %v1845, 0.0
  %v2020 = vmax.f32 %v1850, 0.0
  %v2021 = vmax.f32 %v1855, 0.0
  %v2022 = vmax.f32 %v1860, 0.0
  %v2023 = vmax.f32 %v1865, 0.0
  %v2024 = vmax.f32 %v1870, 0.0
  %v2025 = vmax.f32 %v1875, 0.0
  %v2026 = vmax.f32 %v1880, 0.0
  %v2027 = vmax.f32 %v1885, 0.0
  %v2028 = vmax.f32 %v1890, 0.0
  %v2029 = vmax.f32 %v1895, 0.0
  %v2030 = vmax.f32 %v1900, 0.0
  %v2031 = vmax.f32 %v1905, 0.0
  %v2032 = vmax.f32 %v1910, 0.0
  %v2033 = vmax.f32 %v1915, 0.0
  %v2034 = vmax.f32 %v1920, 0.0
  %v2035 = vmax.f32 %v1925, 0.0
  %v2036 = vmax.f32 %v1930, 0.0
  %v2037 = vmax.f32 %v1935, 0.0
  %v2038 = vmax.f32 %v1940, 0.0
  %v2039 = vmax.f32 %v1945, 0.0
  %v2040 = vmax.f32 %v1950, 0.0
  %v2041 = vmax.f32 %v1955, 0.0
  %v2042 = vmax.f32 %v1960, 0.0
  %v2043 = vmax.f32 %v1965, 0.0
  %v2044 = vmax.f32 %v1970, 0.0
  %v2045 = vmax.f32 %v1975, 0.0
  %v2046 = vmax.f32 %v1980, 0.0
  %v2047 = vld [vmem:[%s5] sm:$0xff]
  %v2048 = vld [vmem:[%s5 + $0x8] sm:$0xff]
  %v2049 = vld [vmem:[%s5 + $0x10] sm:$0xff]
  %v2050 = vld [vmem:[%s5 + $0x18] sm:$0xff]
  %v2051 = vld [vmem:[%s5 + $0x20] sm:$0xff]
  %v2052 = vld [vmem:[%s5 + $0x28] sm:$0xff]
  %v2053 = vld [vmem:[%s5 + $0x30] sm:$0xff]
  %v2054 = vld [vmem:[%s5 + $0x38] sm:$0xff]
  %v2055 = vld [vmem:[%s5 + $0x40] sm:$0xff]
  %v2056 = vld [vmem:[%s5 + $0x48] sm:$0xff]
  %v2057 = vld [vmem:[%s5 + $0x50] sm:$0xff]
  %v2058 = vld [vmem:[%s5 + $0x58] sm:$0xff]
  %v2059 = vld [vmem:[%s5 + $0x60] sm:$0xff]
  %v2060 = vld [vmem:[%s5 + $0x68] sm:$0xff]
  %v2061 = vld [vmem:[%s5 + $0x70] sm:$0xff]
  %v2062 = vld [vmem:[%s5 + $0x78] sm:$0xff]
  %v2063 = vld [vmem:[%s6] sm:$0x1]
  %v2065 = vlaneseq
  %v2066 = vshrl.u32 %v2065, 7
  %v2067 = vsub.s32 0, %v2066
  %v2068 = vrot.slane %v2063, %v2067
  %2070 = vmatprep.subr.mxu0 0.0
  %2071 = vmatpush1.msra.mxu0 %v2047
  %2072 = vmatprep.subr.mxu0 0.0
  %2073 = vmatpush1.msra.mxu0 %v2048
  %2074 = vmatprep.subr.mxu0 0.0
  %2075 = vmatpush1.msra.mxu0 %v2049
  %2076 = vmatprep.subr.mxu0 0.0
  %2077 = vmatpush1.msra.mxu0 %v2050
  %2078 = vmatprep.subr.mxu0 0.0
  %2079 = vmatpush1.msra.mxu0 %v2051
  %2080 = vmatprep.subr.mxu0 0.0
  %2081 = vmatpush1.msra.mxu0 %v2052
  %2082 = vmatprep.subr.mxu0 0.0
  %2083 = vmatpush1.msra.mxu0 %v2053
  %2084 = vmatprep.subr.mxu0 0.0
  %2085 = vmatpush1.msra.mxu0 %v2054
  %2086 = vmatprep.subr.mxu0 0.0
  %2087 = vmatpush1.msra.mxu0 %v2055
  %2088 = vmatprep.subr.mxu0 0.0
  %2089 = vmatpush1.msra.mxu0 %v2056
  %2090 = vmatprep.subr.mxu0 0.0
  %2091 = vmatpush1.msra.mxu0 %v2057
  %2092 = vmatprep.subr.mxu0 0.0
  %2093 = vmatpush1.msra.mxu0 %v2058
  %2094 = vmatprep.subr.mxu0 0.0
  %2095 = vmatpush1.msra.mxu0 %v2059
  %2096 = vmatprep.subr.mxu0 0.0
  %2097 = vmatpush1.msra.mxu0 %v2060
  %2098 = vmatprep.subr.mxu0 0.0
  %2099 = vmatpush1.msra.mxu0 %v2061
  %2100 = vmatprep.subr.mxu0 0.0
  %2101 = vmatpush1.msra.mxu0 %v2062
  %2102 = vmatprep.subr.mxu0 0.0
  %2103 = vmatpush1.msra.mxu0 0.0
  %2104 = vmatprep.subr.mxu0 0.0
  %2105 = vmatpush1.msra.mxu0 0.0
  %2106 = vmatprep.subr.mxu0 0.0
  %2107 = vmatpush1.msra.mxu0 0.0
  %2108 = vmatprep.subr.mxu0 0.0
  %2109 = vmatpush1.msra.mxu0 0.0
  %2110 = vmatprep.subr.mxu0 0.0
  %2111 = vmatpush1.msra.mxu0 0.0
  %2112 = vmatprep.subr.mxu0 0.0
  %2113 = vmatpush1.msra.mxu0 0.0
  %2114 = vmatprep.subr.mxu0 0.0
  %2115 = vmatpush1.msra.mxu0 0.0
  %2116 = vmatprep.subr.mxu0 0.0
  %2117 = vmatpush1.msra.mxu0 0.0
  %2118 = vmatprep.subr.mxu0 0.0
  %2119 = vmatpush1.msra.mxu0 0.0
  %2120 = vmatprep.subr.mxu0 0.0
  %2121 = vmatpush1.msra.mxu0 0.0
  %2122 = vmatprep.subr.mxu0 0.0
  %2123 = vmatpush1.msra.mxu0 0.0
  %2124 = vmatprep.subr.mxu0 0.0
  %2125 = vmatpush1.msra.mxu0 0.0
  %2126 = vmatprep.subr.mxu0 0.0
  %2127 = vmatpush1.msra.mxu0 0.0
  %2128 = vmatprep.subr.mxu0 0.0
  %2129 = vmatpush1.msra.mxu0 0.0
  %2130 = vmatprep.subr.mxu0 0.0
  %2131 = vmatpush1.msra.mxu0 0.0
  %2132 = vmatprep.subr.mxu0 0.0
  %2133 = vmatpush1.msra.mxu0 0.0
  %2134 = vmatprep.mubr.f32.mxu0 0.0
  %2135 = vmatmul.mubr.f32.gmra.mrb[0].mxu0 %v1983
  %v2136 = vpop.f32.mrb[0].mxu0
  %v2137 = vadd.f32 %v2068, %v2136
  %v2138 = vpop.f32.mrb[0].mxu0
  %2139 = vmatprep.mubr.f32.mxu0 0.0
  %2140 = vmatmul.mubr.f32.gmra.mrb[0].mxu0 %v1984
  %v2141 = vpop.f32.mrb[0].mxu0
  %v2142 = vadd.f32 %v2068, %v2141
  %v2143 = vpop.f32.mrb[0].mxu0
  %2144 = vmatprep.mubr.f32.mxu0 0.0
  %2145 = vmatmul.mubr.f32.gmra.mrb[0].mxu0 %v1985
  %v2146 = vpop.f32.mrb[0].mxu0
  %v2147 = vadd.f32 %v2068, %v2146
  %v2148 = vpop.f32.mrb[0].mxu0
  %2149 = vmatprep.mubr.f32.mxu0 0.0
  %2150 = vmatmul.mubr.f32.gmra.mrb[0].mxu0 %v1986
  %v2151 = vpop.f32.mrb[0].mxu0
  %v2152 = vadd.f32 %v2068, %v2151
  %v2153 = vpop.f32.mrb[0].mxu0
  %2154 = vmatprep.mubr.f32.mxu0 0.0
  %2155 = vmatmul.mubr.f32.gmra.mrb[0].mxu0 %v1987
  %v2156 = vpop.f32.mrb[0].mxu0
  %v2157 = vadd.f32 %v2068, %v2156
  %v2158 = vpop.f32.mrb[0].mxu0
  %2159 = vmatprep.mubr.f32.mxu0 0.0
  %2160 = vmatmul.mubr.f32.gmra.mrb[0].mxu0 %v1988
  %v2161 = vpop.f32.mrb[0].mxu0
  %v2162 = vadd.f32 %v2068, %v2161
  %v2163 = vpop.f32.mrb[0].mxu0
  %2164 = vmatprep.mubr.f32.mxu0 0.0
  %2165 = vmatmul.mubr.f32.gmra.mrb[0].mxu0 %v1989
  %v2166 = vpop.f32.mrb[0].mxu0
  %v2167 = vadd.f32 %v2068, %v2166
  %v2168 = vpop.f32.mrb[0].mxu0
  %2169 = vmatprep.mubr.f32.mxu0 0.0
  %2170 = vmatmul.mubr.f32.gmra.mrb[0].mxu0 %v1990
  %v2171 = vpop.f32.mrb[0].mxu0
  %v2172 = vadd.f32 %v2068, %v2171
  %v2173 = vpop.f32.mrb[0].mxu0
  %2174 = vmatprep.mubr.f32.mxu0 0.0
  %2175 = vmatmul.mubr.f32.gmra.mrb[0].mxu0 %v1991
  %v2176 = vpop.f32.mrb[0].mxu0
  %v2177 = vadd.f32 %v2068, %v2176
  %v2178 = vpop.f32.mrb[0].mxu0
  %2179 = vmatprep.mubr.f32.mxu0 0.0
  %2180 = vmatmul.mubr.f32.gmra.mrb[0].mxu0 %v1992
  %v2181 = vpop.f32.mrb[0].mxu0
  %v2182 = vadd.f32 %v2068, %v2181
  %v2183 = vpop.f32.mrb[0].mxu0
  %2184 = vmatprep.mubr.f32.mxu0 0.0
  %2185 = vmatmul.mubr.f32.gmra.mrb[0].mxu0 %v1993
  %v2186 = vpop.f32.mrb[0].mxu0
  %v2187 = vadd.f32 %v2068, %v2186
  %v2188 = vpop.f32.mrb[0].mxu0
  %2189 = vmatprep.mubr.f32.mxu0 0.0
  %2190 = vmatmul.mubr.f32.gmra.mrb[0].mxu0 %v1994
  %v2191 = vpop.f32.mrb[0].mxu0
  %v2192 = vadd.f32 %v2068, %v2191
  %v2193 = vpop.f32.mrb[0].mxu0
  %2194 = vmatprep.mubr.f32.mxu0 0.0
  %2195 = vmatmul.mubr.f32.gmra.mrb[0].mxu0 %v1995
  %v2196 = vpop.f32.mrb[0].mxu0
  %v2197 = vadd.f32 %v2068, %v2196
  %v2198 = vpop.f32.mrb[0].mxu0
  %2199 = vmatprep.mubr.f32.mxu0 0.0
  %2200 = vmatmul.mubr.f32.gmra.mrb[0].mxu0 %v1996
  %v2201 = vpop.f32.mrb[0].mxu0
  %v2202 = vadd.f32 %v2068, %v2201
  %v2203 = vpop.f32.mrb[0].mxu0
  %2204 = vmatprep.mubr.f32.mxu0 0.0
  %2205 = vmatmul.mubr.f32.gmra.mrb[0].mxu0 %v1997
  %v2206 = vpop.f32.mrb[0].mxu0
  %v2207 = vadd.f32 %v2068, %v2206
  %v2208 = vpop.f32.mrb[0].mxu0
  %2209 = vmatprep.mubr.f32.mxu0 0.0
  %2210 = vmatmul.mubr.f32.gmra.mrb[0].mxu0 %v1998
  %v2211 = vpop.f32.mrb[0].mxu0
  %v2212 = vadd.f32 %v2068, %v2211
  %v2213 = vpop.f32.mrb[0].mxu0
  %2214 = vmatprep.mubr.f32.mxu0 0.0
  %2215 = vmatmul.mubr.f32.gmra.mrb[0].mxu0 %v1999
  %v2216 = vpop.f32.mrb[0].mxu0
  %v2217 = vadd.f32 %v2068, %v2216
  %v2218 = vpop.f32.mrb[0].mxu0
  %2219 = vmatprep.mubr.f32.mxu0 0.0
  %2220 = vmatmul.mubr.f32.gmra.mrb[0].mxu0 %v2000
  %v2221 = vpop.f32.mrb[0].mxu0
  %v2222 = vadd.f32 %v2068, %v2221
  %v2223 = vpop.f32.mrb[0].mxu0
  %2224 = vmatprep.mubr.f32.mxu0 0.0
  %2225 = vmatmul.mubr.f32.gmra.mrb[0].mxu0 %v2001
  %v2226 = vpop.f32.mrb[0].mxu0
  %v2227 = vadd.f32 %v2068, %v2226
  %v2228 = vpop.f32.mrb[0].mxu0
  %2229 = vmatprep.mubr.f32.mxu0 0.0
  %2230 = vmatmul.mubr.f32.gmra.mrb[0].mxu0 %v2002
  %v2231 = vpop.f32.mrb[0].mxu0
  %v2232 = vadd.f32 %v2068, %v2231
  %v2233 = vpop.f32.mrb[0].mxu0
  %2234 = vmatprep.mubr.f32.mxu0 0.0
  %2235 = vmatmul.mubr.f32.gmra.mrb[0].mxu0 %v2003
  %v2236 = vpop.f32.mrb[0].mxu0
  %v2237 = vadd.f32 %v2068, %v2236
  %v2238 = vpop.f32.mrb[0].mxu0
  %2239 = vmatprep.mubr.f32.mxu0 0.0
  %2240 = vmatmul.mubr.f32.gmra.mrb[0].mxu0 %v2004
  %v2241 = vpop.f32.mrb[0].mxu0
  %v2242 = vadd.f32 %v2068, %v2241
  %v2243 = vpop.f32.mrb[0].mxu0
  %2244 = vmatprep.mubr.f32.mxu0 0.0
  %2245 = vmatmul.mubr.f32.gmra.mrb[0].mxu0 %v2005
  %v2246 = vpop.f32.mrb[0].mxu0
  %v2247 = vadd.f32 %v2068, %v2246
  %v2248 = vpop.f32.mrb[0].mxu0
  %2249 = vmatprep.mubr.f32.mxu0 0.0
  %2250 = vmatmul.mubr.f32.gmra.mrb[0].mxu0 %v2006
  %v2251 = vpop.f32.mrb[0].mxu0
  %v2252 = vadd.f32 %v2068, %v2251
  %v2253 = vpop.f32.mrb[0].mxu0
  %2254 = vmatprep.mubr.f32.mxu0 0.0
  %2255 = vmatmul.mubr.f32.gmra.mrb[0].mxu0 %v2007
  %v2256 = vpop.f32.mrb[0].mxu0
  %v2257 = vadd.f32 %v2068, %v2256
  %v2258 = vpop.f32.mrb[0].mxu0
  %2259 = vmatprep.mubr.f32.mxu0 0.0
  %2260 = vmatmul.mubr.f32.gmra.mrb[0].mxu0 %v2008
  %v2261 = vpop.f32.mrb[0].mxu0
  %v2262 = vadd.f32 %v2068, %v2261
  %v2263 = vpop.f32.mrb[0].mxu0
  %2264 = vmatprep.mubr.f32.mxu0 0.0
  %2265 = vmatmul.mubr.f32.gmra.mrb[0].mxu0 %v2009
  %v2266 = vpop.f32.mrb[0].mxu0
  %v2267 = vadd.f32 %v2068, %v2266
  %v2268 = vpop.f32.mrb[0].mxu0
  %2269 = vmatprep.mubr.f32.mxu0 0.0
  %2270 = vmatmul.mubr.f32.gmra.mrb[0].mxu0 %v2010
  %v2271 = vpop.f32.mrb[0].mxu0
  %v2272 = vadd.f32 %v2068, %v2271
  %v2273 = vpop.f32.mrb[0].mxu0
  %2274 = vmatprep.mubr.f32.mxu0 0.0
  %2275 = vmatmul.mubr.f32.gmra.mrb[0].mxu0 %v2011
  %v2276 = vpop.f32.mrb[0].mxu0
  %v2277 = vadd.f32 %v2068, %v2276
  %v2278 = vpop.f32.mrb[0].mxu0
  %2279 = vmatprep.mubr.f32.mxu0 0.0
  %2280 = vmatmul.mubr.f32.gmra.mrb[0].mxu0 %v2012
  %v2281 = vpop.f32.mrb[0].mxu0
  %v2282 = vadd.f32 %v2068, %v2281
  %v2283 = vpop.f32.mrb[0].mxu0
  %2284 = vmatprep.mubr.f32.mxu0 0.0
  %2285 = vmatmul.mubr.f32.gmra.mrb[0].mxu0 %v2013
  %v2286 = vpop.f32.mrb[0].mxu0
  %v2287 = vadd.f32 %v2068, %v2286
  %v2288 = vpop.f32.mrb[0].mxu0
  %2289 = vmatprep.mubr.f32.mxu0 0.0
  %2290 = vmatmul.mubr.f32.gmra.mrb[0].mxu0 %v2014
  %v2291 = vpop.f32.mrb[0].mxu0
  %v2292 = vadd.f32 %v2068, %v2291
  %v2293 = vpop.f32.mrb[0].mxu0
  %2294 = vmatprep.mubr.f32.mxu0 0.0
  %2295 = vmatmul.mubr.f32.gmra.mrb[0].mxu0 %v2015
  %v2296 = vpop.f32.mrb[0].mxu0
  %v2297 = vadd.f32 %v2068, %v2296
  %v2298 = vpop.f32.mrb[0].mxu0
  %2299 = vmatprep.mubr.f32.mxu0 0.0
  %2300 = vmatmul.mubr.f32.gmra.mrb[0].mxu0 %v2016
  %v2301 = vpop.f32.mrb[0].mxu0
  %v2302 = vadd.f32 %v2068, %v2301
  %v2303 = vpop.f32.mrb[0].mxu0
  %2304 = vmatprep.mubr.f32.mxu0 0.0
  %2305 = vmatmul.mubr.f32.gmra.mrb[0].mxu0 %v2017
  %v2306 = vpop.f32.mrb[0].mxu0
  %v2307 = vadd.f32 %v2068, %v2306
  %v2308 = vpop.f32.mrb[0].mxu0
  %2309 = vmatprep.mubr.f32.mxu0 0.0
  %2310 = vmatmul.mubr.f32.gmra.mrb[0].mxu0 %v2018
  %v2311 = vpop.f32.mrb[0].mxu0
  %v2312 = vadd.f32 %v2068, %v2311
  %v2313 = vpop.f32.mrb[0].mxu0
  %2314 = vmatprep.mubr.f32.mxu0 0.0
  %2315 = vmatmul.mubr.f32.gmra.mrb[0].mxu0 %v2019
  %v2316 = vpop.f32.mrb[0].mxu0
  %v2317 = vadd.f32 %v2068, %v2316
  %v2318 = vpop.f32.mrb[0].mxu0
  %2319 = vmatprep.mubr.f32.mxu0 0.0
  %2320 = vmatmul.mubr.f32.gmra.mrb[0].mxu0 %v2020
  %v2321 = vpop.f32.mrb[0].mxu0
  %v2322 = vadd.f32 %v2068, %v2321
  %v2323 = vpop.f32.mrb[0].mxu0
  %2324 = vmatprep.mubr.f32.mxu0 0.0
  %2325 = vmatmul.mubr.f32.gmra.mrb[0].mxu0 %v2021
  %v2326 = vpop.f32.mrb[0].mxu0
  %v2327 = vadd.f32 %v2068, %v2326
  %v2328 = vpop.f32.mrb[0].mxu0
  %2329 = vmatprep.mubr.f32.mxu0 0.0
  %2330 = vmatmul.mubr.f32.gmra.mrb[0].mxu0 %v2022
  %v2331 = vpop.f32.mrb[0].mxu0
  %v2332 = vadd.f32 %v2068, %v2331
  %v2333 = vpop.f32.mrb[0].mxu0
  %2334 = vmatprep.mubr.f32.mxu0 0.0
  %2335 = vmatmul.mubr.f32.gmra.mrb[0].mxu0 %v2023
  %v2336 = vpop.f32.mrb[0].mxu0
  %v2337 = vadd.f32 %v2068, %v2336
  %v2338 = vpop.f32.mrb[0].mxu0
  %2339 = vmatprep.mubr.f32.mxu0 0.0
  %2340 = vmatmul.mubr.f32.gmra.mrb[0].mxu0 %v2024
  %v2341 = vpop.f32.mrb[0].mxu0
  %v2342 = vadd.f32 %v2068, %v2341
  %v2343 = vpop.f32.mrb[0].mxu0
  %2344 = vmatprep.mubr.f32.mxu0 0.0
  %2345 = vmatmul.mubr.f32.gmra.mrb[0].mxu0 %v2025
  %v2346 = vpop.f32.mrb[0].mxu0
  %v2347 = vadd.f32 %v2068, %v2346
  %v2348 = vpop.f32.mrb[0].mxu0
  %2349 = vmatprep.mubr.f32.mxu0 0.0
  %2350 = vmatmul.mubr.f32.gmra.mrb[0].mxu0 %v2026
  %v2351 = vpop.f32.mrb[0].mxu0
  %v2352 = vadd.f32 %v2068, %v2351
  %v2353 = vpop.f32.mrb[0].mxu0
  %2354 = vmatprep.mubr.f32.mxu0 0.0
  %2355 = vmatmul.mubr.f32.gmra.mrb[0].mxu0 %v2027
  %v2356 = vpop.f32.mrb[0].mxu0
  %v2357 = vadd.f32 %v2068, %v2356
  %v2358 = vpop.f32.mrb[0].mxu0
  %2359 = vmatprep.mubr.f32.mxu0 0.0
  %2360 = vmatmul.mubr.f32.gmra.mrb[0].mxu0 %v2028
  %v2361 = vpop.f32.mrb[0].mxu0
  %v2362 = vadd.f32 %v2068, %v2361
  %v2363 = vpop.f32.mrb[0].mxu0
  %2364 = vmatprep.mubr.f32.mxu0 0.0
  %2365 = vmatmul.mubr.f32.gmra.mrb[0].mxu0 %v2029
  %v2366 = vpop.f32.mrb[0].mxu0
  %v2367 = vadd.f32 %v2068, %v2366
  %v2368 = vpop.f32.mrb[0].mxu0
  %2369 = vmatprep.mubr.f32.mxu0 0.0
  %2370 = vmatmul.mubr.f32.gmra.mrb[0].mxu0 %v2030
  %v2371 = vpop.f32.mrb[0].mxu0
  %v2372 = vadd.f32 %v2068, %v2371
  %v2373 = vpop.f32.mrb[0].mxu0
  %2374 = vmatprep.mubr.f32.mxu0 0.0
  %2375 = vmatmul.mubr.f32.gmra.mrb[0].mxu0 %v2031
  %v2376 = vpop.f32.mrb[0].mxu0
  %v2377 = vadd.f32 %v2068, %v2376
  %v2378 = vpop.f32.mrb[0].mxu0
  %2379 = vmatprep.mubr.f32.mxu0 0.0
  %2380 = vmatmul.mubr.f32.gmra.mrb[0].mxu0 %v2032
  %v2381 = vpop.f32.mrb[0].mxu0
  %v2382 = vadd.f32 %v2068, %v2381
  %v2383 = vpop.f32.mrb[0].mxu0
  %2384 = vmatprep.mubr.f32.mxu0 0.0
  %2385 = vmatmul.mubr.f32.gmra.mrb[0].mxu0 %v2033
  %v2386 = vpop.f32.mrb[0].mxu0
  %v2387 = vadd.f32 %v2068, %v2386
  %v2388 = vpop.f32.mrb[0].mxu0
  %2389 = vmatprep.mubr.f32.mxu0 0.0
  %2390 = vmatmul.mubr.f32.gmra.mrb[0].mxu0 %v2034
  %v2391 = vpop.f32.mrb[0].mxu0
  %v2392 = vadd.f32 %v2068, %v2391
  %v2393 = vpop.f32.mrb[0].mxu0
  %2394 = vmatprep.mubr.f32.mxu0 0.0
  %2395 = vmatmul.mubr.f32.gmra.mrb[0].mxu0 %v2035
  %v2396 = vpop.f32.mrb[0].mxu0
  %v2397 = vadd.f32 %v2068, %v2396
  %v2398 = vpop.f32.mrb[0].mxu0
  %2399 = vmatprep.mubr.f32.mxu0 0.0
  %2400 = vmatmul.mubr.f32.gmra.mrb[0].mxu0 %v2036
  %v2401 = vpop.f32.mrb[0].mxu0
  %v2402 = vadd.f32 %v2068, %v2401
  %v2403 = vpop.f32.mrb[0].mxu0
  %2404 = vmatprep.mubr.f32.mxu0 0.0
  %2405 = vmatmul.mubr.f32.gmra.mrb[0].mxu0 %v2037
  %v2406 = vpop.f32.mrb[0].mxu0
  %v2407 = vadd.f32 %v2068, %v2406
  %v2408 = vpop.f32.mrb[0].mxu0
  %2409 = vmatprep.mubr.f32.mxu0 0.0
  %2410 = vmatmul.mubr.f32.gmra.mrb[0].mxu0 %v2038
  %v2411 = vpop.f32.mrb[0].mxu0
  %v2412 = vadd.f32 %v2068, %v2411
  %v2413 = vpop.f32.mrb[0].mxu0
  %2414 = vmatprep.mubr.f32.mxu0 0.0
  %2415 = vmatmul.mubr.f32.gmra.mrb[0].mxu0 %v2039
  %v2416 = vpop.f32.mrb[0].mxu0
  %v2417 = vadd.f32 %v2068, %v2416
  %v2418 = vpop.f32.mrb[0].mxu0
  %2419 = vmatprep.mubr.f32.mxu0 0.0
  %2420 = vmatmul.mubr.f32.gmra.mrb[0].mxu0 %v2040
  %v2421 = vpop.f32.mrb[0].mxu0
  %v2422 = vadd.f32 %v2068, %v2421
  %v2423 = vpop.f32.mrb[0].mxu0
  %2424 = vmatprep.mubr.f32.mxu0 0.0
  %2425 = vmatmul.mubr.f32.gmra.mrb[0].mxu0 %v2041
  %v2426 = vpop.f32.mrb[0].mxu0
  %v2427 = vadd.f32 %v2068, %v2426
  %v2428 = vpop.f32.mrb[0].mxu0
  %2429 = vmatprep.mubr.f32.mxu0 0.0
  %2430 = vmatmul.mubr.f32.gmra.mrb[0].mxu0 %v2042
  %v2431 = vpop.f32.mrb[0].mxu0
  %v2432 = vadd.f32 %v2068, %v2431
  %v2433 = vpop.f32.mrb[0].mxu0
  %2434 = vmatprep.mubr.f32.mxu0 0.0
  %2435 = vmatmul.mubr.f32.gmra.mrb[0].mxu0 %v2043
  %v2436 = vpop.f32.mrb[0].mxu0
  %v2437 = vadd.f32 %v2068, %v2436
  %v2438 = vpop.f32.mrb[0].mxu0
  %2439 = vmatprep.mubr.f32.mxu0 0.0
  %2440 = vmatmul.mubr.f32.gmra.mrb[0].mxu0 %v2044
  %v2441 = vpop.f32.mrb[0].mxu0
  %v2442 = vadd.f32 %v2068, %v2441
  %v2443 = vpop.f32.mrb[0].mxu0
  %2444 = vmatprep.mubr.f32.mxu0 0.0
  %2445 = vmatmul.mubr.f32.gmra.mrb[0].mxu0 %v2045
  %v2446 = vpop.f32.mrb[0].mxu0
  %v2447 = vadd.f32 %v2068, %v2446
  %v2448 = vpop.f32.mrb[0].mxu0
  %2449 = vmatprep.mubr.f32.mxu0 0.0
  %2450 = vmatmul.mubr.f32.gmra.mrb[0].mxu0 %v2046
  %v2451 = vpop.f32.mrb[0].mxu0
  %v2452 = vadd.f32 %v2068, %v2451
  %v2453 = vpop.f32.mrb[0].mxu0
  %2454 = vdwg.mxu0
  %vm2455 = vcmask 31744
  %2456 = vst.msk [vmem:[%s7] sm:$0xff] %vm2455, %v2137
  %2457 = vst.msk [vmem:[%s7 + $0x8] sm:$0xff] %vm2455, %v2142
  %2458 = vst.msk [vmem:[%s7 + $0x10] sm:$0xff] %vm2455, %v2147
  %2459 = vst.msk [vmem:[%s7 + $0x18] sm:$0xff] %vm2455, %v2152
  %2460 = vst.msk [vmem:[%s7 + $0x20] sm:$0xff] %vm2455, %v2157
  %2461 = vst.msk [vmem:[%s7 + $0x28] sm:$0xff] %vm2455, %v2162
  %2462 = vst.msk [vmem:[%s7 + $0x30] sm:$0xff] %vm2455, %v2167
  %2463 = vst.msk [vmem:[%s7 + $0x38] sm:$0xff] %vm2455, %v2172
  %2464 = vst.msk [vmem:[%s7 + $0x40] sm:$0xff] %vm2455, %v2177
  %2465 = vst.msk [vmem:[%s7 + $0x48] sm:$0xff] %vm2455, %v2182
  %2466 = vst.msk [vmem:[%s7 + $0x50] sm:$0xff] %vm2455, %v2187
  %2467 = vst.msk [vmem:[%s7 + $0x58] sm:$0xff] %vm2455, %v2192
  %2468 = vst.msk [vmem:[%s7 + $0x60] sm:$0xff] %vm2455, %v2197
  %2469 = vst.msk [vmem:[%s7 + $0x68] sm:$0xff] %vm2455, %v2202
  %2470 = vst.msk [vmem:[%s7 + $0x70] sm:$0xff] %vm2455, %v2207
  %2471 = vst.msk [vmem:[%s7 + $0x78] sm:$0xff] %vm2455, %v2212
  %2472 = vst.msk [vmem:[%s7 + $0x80] sm:$0xff] %vm2455, %v2217
  %2473 = vst.msk [vmem:[%s7 + $0x88] sm:$0xff] %vm2455, %v2222
  %2474 = vst.msk [vmem:[%s7 + $0x90] sm:$0xff] %vm2455, %v2227
  %2475 = vst.msk [vmem:[%s7 + $0x98] sm:$0xff] %vm2455, %v2232
  %2476 = vst.msk [vmem:[%s7 + $0xa0] sm:$0xff] %vm2455, %v2237
  %2477 = vst.msk [vmem:[%s7 + $0xa8] sm:$0xff] %vm2455, %v2242
  %2478 = vst.msk [vmem:[%s7 + $0xb0] sm:$0xff] %vm2455, %v2247
  %2479 = vst.msk [vmem:[%s7 + $0xb8] sm:$0xff] %vm2455, %v2252
  %2480 = vst.msk [vmem:[%s7 + $0xc0] sm:$0xff] %vm2455, %v2257
  %2481 = vst.msk [vmem:[%s7 + $0xc8] sm:$0xff] %vm2455, %v2262
  %2482 = vst.msk [vmem:[%s7 + $0xd0] sm:$0xff] %vm2455, %v2267
  %2483 = vst.msk [vmem:[%s7 + $0xd8] sm:$0xff] %vm2455, %v2272
  %2484 = vst.msk [vmem:[%s7 + $0xe0] sm:$0xff] %vm2455, %v2277
  %2485 = vst.msk [vmem:[%s7 + $0xe8] sm:$0xff] %vm2455, %v2282
  %2486 = vst.msk [vmem:[%s7 + $0xf0] sm:$0xff] %vm2455, %v2287
  %2487 = vst.msk [vmem:[%s7 + $0xf8] sm:$0xff] %vm2455, %v2292
  %2488 = vst.msk [vmem:[%s7 + $0x100] sm:$0xff] %vm2455, %v2297
  %2489 = vst.msk [vmem:[%s7 + $0x108] sm:$0xff] %vm2455, %v2302
  %2490 = vst.msk [vmem:[%s7 + $0x110] sm:$0xff] %vm2455, %v2307
  %2491 = vst.msk [vmem:[%s7 + $0x118] sm:$0xff] %vm2455, %v2312
  %2492 = vst.msk [vmem:[%s7 + $0x120] sm:$0xff] %vm2455, %v2317
  %2493 = vst.msk [vmem:[%s7 + $0x128] sm:$0xff] %vm2455, %v2322
  %2494 = vst.msk [vmem:[%s7 + $0x130] sm:$0xff] %vm2455, %v2327
  %2495 = vst.msk [vmem:[%s7 + $0x138] sm:$0xff] %vm2455, %v2332
  %2496 = vst.msk [vmem:[%s7 + $0x140] sm:$0xff] %vm2455, %v2337
  %2497 = vst.msk [vmem:[%s7 + $0x148] sm:$0xff] %vm2455, %v2342
  %2498 = vst.msk [vmem:[%s7 + $0x150] sm:$0xff] %vm2455, %v2347
  %2499 = vst.msk [vmem:[%s7 + $0x158] sm:$0xff] %vm2455, %v2352
  %2500 = vst.msk [vmem:[%s7 + $0x160] sm:$0xff] %vm2455, %v2357
  %2501 = vst.msk [vmem:[%s7 + $0x168] sm:$0xff] %vm2455, %v2362
  %2502 = vst.msk [vmem:[%s7 + $0x170] sm:$0xff] %vm2455, %v2367
  %2503 = vst.msk [vmem:[%s7 + $0x178] sm:$0xff] %vm2455, %v2372
  %2504 = vst.msk [vmem:[%s7 + $0x180] sm:$0xff] %vm2455, %v2377
  %2505 = vst.msk [vmem:[%s7 + $0x188] sm:$0xff] %vm2455, %v2382
  %2506 = vst.msk [vmem:[%s7 + $0x190] sm:$0xff] %vm2455, %v2387
  %2507 = vst.msk [vmem:[%s7 + $0x198] sm:$0xff] %vm2455, %v2392
  %2508 = vst.msk [vmem:[%s7 + $0x1a0] sm:$0xff] %vm2455, %v2397
  %2509 = vst.msk [vmem:[%s7 + $0x1a8] sm:$0xff] %vm2455, %v2402
  %2510 = vst.msk [vmem:[%s7 + $0x1b0] sm:$0xff] %vm2455, %v2407
  %2511 = vst.msk [vmem:[%s7 + $0x1b8] sm:$0xff] %vm2455, %v2412
  %2512 = vst.msk [vmem:[%s7 + $0x1c0] sm:$0xff] %vm2455, %v2417
  %2513 = vst.msk [vmem:[%s7 + $0x1c8] sm:$0xff] %vm2455, %v2422
  %2514 = vst.msk [vmem:[%s7 + $0x1d0] sm:$0xff] %vm2455, %v2427
  %2515 = vst.msk [vmem:[%s7 + $0x1d8] sm:$0xff] %vm2455, %v2432
  %2516 = vst.msk [vmem:[%s7 + $0x1e0] sm:$0xff] %vm2455, %v2437
  %2517 = vst.msk [vmem:[%s7 + $0x1e8] sm:$0xff] %vm2455, %v2442
  %2518 = vst.msk [vmem:[%s7 + $0x1f0] sm:$0xff] %vm2455, %v2447
  %2519 = vst.msk [vmem:[%s7 + $0x1f8] sm:$0xff] %vm2455, %v2452
  // Predicated region
  $region30: #{tpu_custom_call.1} parent=0 // pred_check
    _
  $region31: #{tpu_custom_call.1} parent=0 // pred_check_branch
    %2521 = sbr.rel (0) target = $region33
  $region32: #{tpu_custom_call.1} parent=0 // pred_region
    _
  $region33: #{tpu_custom_call.1} parent=0 // pred_fallthru
    _
  // Predicated region
  $region34: #{tpu_custom_call.1} parent=0 // pred_check
    _
  $region35: #{tpu_custom_call.1} parent=0 // pred_check_branch
    %2523 = sbr.rel (0) target = $region37
  $region36: #{tpu_custom_call.1} parent=0 // pred_region
    _
  $region37: #{tpu_custom_call.1} parent=0 // pred_fallthru
    _

</llo_original>
